<compile_context>
chip_gen: v7x
topology: tpu7x:2x2x1
jax: 0.10.0
libtpu: 0.0.40
codegen_flags: <defaults>
</compile_context>

<pallas_src>
import functools

import jax
import jax.numpy as jnp
from jax import lax
from jax.experimental import pallas as pl
from jax.experimental.pallas import tpu as pltpu


# ----------------------------- helpers --------------------------------------
def _round_up(x, m):
    return ((x + m - 1) // m) * m


def _is_multi_tensorcore():
    # v7x-style parts have 2 TensorCores per chip; prefer an even row-tile grid.
    try:
        kind = jax.devices()[0].device_kind.lower()
    except Exception:
        return False
    return "v7" in kind


def _vmem_capacity_bytes():
    try:
        cap = int(pltpu.get_tpu_info().vmem_capacity_bytes)
        if cap > 0:
            return cap
    except Exception:
        pass
    return 64 << 20  # conservative fallback (v7x per-TensorCore VMEM)


def _vmem_limit(need_bytes):
    # Accurate per-kernel estimate + margin, clamped to <= ~70% of capacity.
    cap = _vmem_capacity_bytes()
    hi = max(int(cap * 0.70), 8 << 20)
    return int(min(max(need_bytes + (4 << 20), 32 << 20), hi))


def _choose_block_m(np_cols):
    # Row tile.  np_cols is a multiple of 128, so every halving below divides it.
    bm = min(256, np_cols)
    if np_cols % bm:
        bm = 128
    # >= 2 row tiles so ("parallel", ...) can shard across TensorCores.
    while np_cols // bm < 2 and bm > 8:
        bm //= 2
    # Even number of row tiles on multi-TensorCore parts (avoid a 1-tile tail).
    if _is_multi_tensorcore() and (np_cols // bm) % 2 == 1 and bm >= 64:
        bm //= 2
    return max(bm, 8)


def _choose_block_k(np_cols):
    tk = min(512, np_cols)
    while np_cols % tk:
        tk //= 2  # terminates at <=128 since np_cols is a multiple of 128
    return tk


def _pad2(a, rows, cols, dtype):
    a = a.astype(dtype)
    pr, pc = rows - a.shape[0], cols - a.shape[1]
    if pr or pc:
        a = jnp.pad(a, ((0, pr), (0, pc)))
    return a


# ----------------------------- GCN kernels ----------------------------------
def _xw_kernel(x_ref, w_ref, out_ref):
    # support1 = x @ W1'   (bf16 operands, f32 accumulation)
    out_ref[...] = jnp.dot(
        x_ref[...], w_ref[...], preferred_element_type=jnp.float32
    ).astype(out_ref.dtype)


def _hidden_kernel(adj_ref, s1_ref, b1_ref, w2_ref, s2_ref, acc_ref):
    # acc += adj_tile @ support1_tile; on the last k step:
    # s2 = relu(acc + b1) @ W2'  (the hidden activation never leaves VMEM).
    k = pl.program_id(1)

    @pl.when(k == 0)
    def _():
        acc_ref[...] = jnp.zeros_like(acc_ref)

    a = adj_ref[...].astype(jnp.float32).astype(jnp.bfloat16)  # int8 -> bf16
    acc_ref[...] += jnp.dot(a, s1_ref[...], preferred_element_type=jnp.float32)

    @pl.when(k == pl.num_programs(1) - 1)
    def _():
        h = jnp.maximum(acc_ref[...] + b1_ref[...], 0.0)
        # TODO(synk): F.dropout is skipped (inference semantics; training only).
        s2_ref[...] = jnp.dot(
            h.astype(jnp.bfloat16), w2_ref[...],
            preferred_element_type=jnp.float32,
        ).astype(s2_ref.dtype)


def _out_kernel(adj_ref, s2_ref, b2_ref, out_ref, acc_ref):
    # acc += adj_tile @ support2_tile; on the last k step: embeds = acc + b2.
    k = pl.program_id(1)

    @pl.when(k == 0)
    def _():
        acc_ref[...] = jnp.zeros_like(acc_ref)

    a = adj_ref[...].astype(jnp.float32).astype(jnp.bfloat16)  # int8 -> bf16
    acc_ref[...] += jnp.dot(a, s2_ref[...], preferred_element_type=jnp.float32)

    @pl.when(k == pl.num_programs(1) - 1)
    def _():
        out_ref[...] = (acc_ref[...] + b2_ref[...]).astype(out_ref.dtype)


def gcn_forward(x, adj, w1, b1, w2, b2):
    n, nfeat = x.shape
    nhid = w1.shape[1]
    nout = w2.shape[1]

    np_ = _round_up(n, 128)       # padded node count
    bm = _choose_block_m(np_)     # row tile
    tk = _choose_block_k(np_)     # contraction tile
    grid_m = np_ // bm
    grid_k = np_ // tk

    # --- int8 quantization of the streamed adjacency (scalar scale) ---------
    # TODO(synk): adj is static across steps in the original model; in a real
    # pipeline adj_q would be quantized once and cached, not per forward call.
    adj_f = adj.astype(jnp.float32)
    scale = jnp.maximum(jnp.max(jnp.abs(adj_f)), jnp.float32(1e-30)) * (1.0 / 127.0)
    adj_q = jnp.clip(jnp.round(adj_f * (1.0 / scale)), -127.0, 127.0).astype(jnp.int8)
    adj_q = jnp.pad(adj_q, ((0, np_ - n), (0, np_ - n)))

    x_p = _pad2(x, np_, nfeat, jnp.bfloat16)
    # Fold the dequant scale into W1 / W2 so the kernels need no rescale:
    #   (scale*adj_q) @ (x @ W1) == adj_q @ (x @ (scale*W1))
    #   (scale*adj_q) @ (h @ W2) == adj_q @ (h @ (scale*W2))
    w1b = (w1.astype(jnp.float32) * scale).astype(jnp.bfloat16)
    w2b = (w2.astype(jnp.float32) * scale).astype(jnp.bfloat16)
    b1f = b1.reshape(1, nhid).astype(jnp.float32)
    b2f = b2.reshape(1, nout).astype(jnp.float32)

    # --- kernel A: support1 = x @ W1' ---------------------------------------
    need_a = 2 * bm * nfeat * 2 + nfeat * nhid * 2 + 2 * bm * nhid * 2
    s1 = pl.pallas_call(
        _xw_kernel,
        grid=(grid_m,),
        in_specs=[
            pl.BlockSpec((bm, nfeat), lambda i: (i, 0)),
            pl.BlockSpec((nfeat, nhid), lambda i: (0, 0),
                         pipeline_mode=pl.Buffered(1)),
        ],
        out_specs=pl.BlockSpec((bm, nhid), lambda i: (i, 0)),
        out_shape=jax.ShapeDtypeStruct((np_, nhid), jnp.bfloat16),
        compiler_params=pltpu.CompilerParams(
            dimension_semantics=("parallel",),
            vmem_limit_bytes=_vmem_limit(need_a)),
    )(x_p, w1b)

    # --- kernel B: s2 = relu(adj @ support1 + b1) @ W2' ----------------------
    need_b = (2 * bm * tk * 1 + 2 * tk * nhid * 2 + nhid * nout * 2
              + nhid * 4 + bm * nhid * 4 + 2 * bm * nout * 2)
    s2 = pl.pallas_call(
        _hidden_kernel,
        grid=(grid_m, grid_k),
        in_specs=[
            pl.BlockSpec((bm, tk), lambda i, k: (i, k)),              # adj (int8)
            pl.BlockSpec((tk, nhid), lambda i, k: (k, 0)),            # support1
            pl.BlockSpec((1, nhid), lambda i, k: (0, 0),
                         pipeline_mode=pl.Buffered(1)),               # b1
            pl.BlockSpec((nhid, nout), lambda i, k: (0, 0),
                         pipeline_mode=pl.Buffered(1)),               # W2'
        ],
        out_specs=pl.BlockSpec((bm, nout), lambda i, k: (i, 0)),
        out_shape=jax.ShapeDtypeStruct((np_, nout), jnp.bfloat16),
        scratch_shapes=[pltpu.VMEM((bm, nhid), jnp.float32)],
        compiler_params=pltpu.CompilerParams(
            dimension_semantics=("parallel", "arbitrary"),
            vmem_limit_bytes=_vmem_limit(need_b)),
    )(adj_q, s1, b1f, w2b)

    # --- kernel C: embeds = adj @ support2 + b2 ------------------------------
    need_c = (2 * bm * tk * 1 + 2 * tk * nout * 2 + nout * 4
              + bm * nout * 4 + 2 * bm * nout * 4)
    embeds_p = pl.pallas_call(
        _out_kernel,
        grid=(grid_m, grid_k),
        in_specs=[
            pl.BlockSpec((bm, tk), lambda i, k: (i, k)),              # adj (int8)
            pl.BlockSpec((tk, nout), lambda i, k: (k, 0)),            # support2
            pl.BlockSpec((1, nout), lambda i, k: (0, 0),
                         pipeline_mode=pl.Buffered(1)),               # b2
        ],
        out_specs=pl.BlockSpec((bm, nout), lambda i, k: (i, 0)),
        out_shape=jax.ShapeDtypeStruct((np_, nout), jnp.float32),
        scratch_shapes=[pltpu.VMEM((bm, nout), jnp.float32)],
        compiler_params=pltpu.CompilerParams(
            dimension_semantics=("parallel", "arbitrary"),
            vmem_limit_bytes=_vmem_limit(need_c)),
    )(adj_q, s2, b2f)

    return embeds_p[:n]


# --------------------------- Cluster kernels ---------------------------------
def _make_cluster_update_kernel(cluster_temp, n_real, bm):
    cluster_temp = float(cluster_temp)

    def kernel(emb_ref, mut_ref, mut_out_ref, cm_ref, cr_ref):
        i = pl.program_id(0)

        @pl.when(i == 0)
        def _():
            cm_ref[...] = jnp.zeros_like(cm_ref)
            cr_ref[...] = jnp.zeros_like(cr_ref)

        # Row-normalize the embedding tile (rsqrt on the EUP, eps guarded).
        data = emb_ref[...].astype(jnp.float32)                       # (bm, d)
        nsq = jnp.sum(data * data, axis=1, keepdims=True)
        data = data * lax.rsqrt(jnp.maximum(nsq, jnp.float32(1e-24)))

        # dist = data @ mu.T  -- mu is carried transposed (d, K): standard matmul.
        dist = jnp.dot(data, mut_ref[...], preferred_element_type=jnp.float32)
        logits = cluster_temp * dist
        logits = logits - jnp.max(logits, axis=1, keepdims=True)
        e = jnp.exp(logits)
        r = e * pl.reciprocal(jnp.sum(e, axis=1, keepdims=True), approx=True)

        # Zero contributions from padded rows of the last tile.
        row = lax.broadcasted_iota(jnp.int32, (bm, 1), 0) + i * bm
        r = jnp.where(row < n_real, r, 0.0)

        # cluster_mean^T accumulation: (d, K) += data^T @ r ; mass: (1, K).
        cm_ref[...] += lax.dot_general(data, r, (((0,), (0,)), ((), ())),
                                       preferred_element_type=jnp.float32)
        cr_ref[...] += jnp.sum(r, axis=0, keepdims=True)

        @pl.when(i == pl.num_programs(0) - 1)
        def _():
            inv = pl.reciprocal(jnp.maximum(cr_ref[...], jnp.float32(1e-20)),
                                approx=True)
            mut_out_ref[...] = cm_ref[...] * inv                      # new mu^T

    return kernel


def _make_cluster_assign_kernel(cluster_temp):
    cluster_temp = float(cluster_temp)

    def kernel(emb_ref, mut_ref, r_ref, dist_ref):
        data = emb_ref[...].astype(jnp.float32)
        nsq = jnp.sum(data * data, axis=1, keepdims=True)
        data = data * lax.rsqrt(jnp.maximum(nsq, jnp.float32(1e-24)))
        dist = jnp.dot(data, mut_ref[...], preferred_element_type=jnp.float32)
        logits = cluster_temp * dist
        logits = logits - jnp.max(logits, axis=1, keepdims=True)
        e = jnp.exp(logits)
        r = e * pl.reciprocal(jnp.sum(e, axis=1, keepdims=True), approx=True)
        r_ref[...] = r
        dist_ref[...] = dist

    return kernel


def cluster_forward(embeds, mu_init, k, cluster_temp, num_iter):
    n, d = embeds.shape
    k = int(k)
    total_updates = int(num_iter) + 1  # forward() runs cluster(num_iter) then cluster(1)

    bm = min(512, _round_up(n, 8))     # row tile over nodes
    np_c = _round_up(n, bm)
    grid_c = np_c // bm

    emb_p = jnp.pad(embeds.astype(jnp.float32), ((0, np_c - n), (0, 0)))
    mut = mu_init.astype(jnp.float32).T                       # (d, K), transposed carry

    upd = pl.pallas_call(
        _make_cluster_update_kernel(cluster_temp, n, bm),
        grid=(grid_c,),
        in_specs=[
            pl.BlockSpec((bm, d), lambda i: (i, 0)),
            pl.BlockSpec((d, k), lambda i: (0, 0), pipeline_mode=pl.Buffered(1)),
        ],
        out_specs=pl.BlockSpec((d, k), lambda i: (0, 0)),
        out_shape=jax.ShapeDtypeStruct((d, k), jnp.float32),
        scratch_shapes=[pltpu.VMEM((d, k), jnp.float32),      # cluster_mean^T
                        pltpu.VMEM((1, k), jnp.float32)],     # cluster mass
        compiler_params=pltpu.CompilerParams(
            dimension_semantics=("arbitrary",),
            vmem_limit_bytes=_vmem_limit(2 * bm * d * 4 + 4 * d * k * 4)),
    )
    for _ in range(total_updates):  # static & small (num_iter + 1)
        mut = upd(emb_p, mut)

    r_p, dist_p = pl.pallas_call(
        _make_cluster_assign_kernel(cluster_temp),
        grid=(grid_c,),
        in_specs=[
            pl.BlockSpec((bm, d), lambda i: (i, 0)),
            pl.BlockSpec((d, k), lambda i: (0, 0), pipeline_mode=pl.Buffered(1)),
        ],
        out_specs=(pl.BlockSpec((bm, k), lambda i: (i, 0)),
                   pl.BlockSpec((bm, k), lambda i: (i, 0))),
        out_shape=(jax.ShapeDtypeStruct((np_c, k), jnp.float32),
                   jax.ShapeDtypeStruct((np_c, k), jnp.float32)),
        compiler_params=pltpu.CompilerParams(
            dimension_semantics=("parallel",),
            vmem_limit_bytes=_vmem_limit(2 * bm * d * 4 + d * k * 4 + 4 * bm * k * 4)),
    )(emb_p, mut)

    return mut.T, r_p[:n], dist_p[:n]


# --------------------------- Full module forward ----------------------------
def gcn_clusternet_forward(params, x, adj, num_iter=1):
    embeds = gcn_forward(x, adj, params["w1"], params["b1"],
                         params["w2"], params["b2"])
    # TODO(synk): the sklearn k-means++ init path of cluster() (init=None) is not
    # implemented; GCNClusterNet.forward always passes init=self.init.
    mu, r, dist = cluster_forward(embeds, params["init_mu"], params["K"],
                                  params["cluster_temp"], num_iter)
    return mu, r, embeds, dist


def init_params(key, nfeat, nhid, nout, K, cluster_temp):
    ks = jax.random.split(key, 6)
    stdv1 = 1.0 / (nhid ** 0.5)
    stdv2 = 1.0 / (nout ** 0.5)
    return {
        "w1": jax.random.uniform(ks[0], (nfeat, nhid), jnp.float32, -stdv1, stdv1),
        "b1": jax.random.uniform(ks[1], (1, nhid), jnp.float32, -stdv1, stdv1),
        "w2": jax.random.uniform(ks[2], (nhid, nout), jnp.float32, -stdv2, stdv2),
        "b2": jax.random.uniform(ks[3], (1, nout), jnp.float32, -stdv2, stdv2),
        # distmult / sigmoid are unused in forward(); kept only for parity.
        "distmult": jax.random.uniform(ks[4], (nout,), jnp.float32),
        "init_mu": jax.random.uniform(ks[5], (K, nout), jnp.float32),
        "K": K,
        "cluster_temp": cluster_temp,
    }


if __name__ == "__main__":
    N, nfeat, nhid, nout, K = 64, 32, 32, 16, 8
    cluster_temp = 5.0
    dropout = 0.5  # unused at inference

    key = jax.random.PRNGKey(0)
    kx, kadj, kparam = jax.random.split(key, 3)

    x = jax.random.uniform(kx, (N, nfeat), jnp.float32)
    a = jax.random.uniform(kadj, (N, N), jnp.float32)
    adj = (a + a.T) * 0.5  # dense symmetric "adjacency"

    params = init_params(kparam, nfeat, nhid, nout, K, cluster_temp)

    fwd = jax.jit(functools.partial(gcn_clusternet_forward, params, num_iter=1))
    mu, r, embeds, dist = fwd(x, adj)
    jax.block_until_ready((mu, r, embeds, dist))

    assert mu.shape == (K, nout)
    assert r.shape == (N, K)
    assert embeds.shape == (N, nout)
    assert dist.shape == (N, K)
    for t in (mu, r, embeds, dist):
        assert bool(jnp.all(jnp.isfinite(t)))
    # soft assignments over the K clusters should sum to ~1 per node
    assert bool(jnp.all(jnp.abs(jnp.sum(r, axis=1) - 1.0) < 5e-2))
    print("KERNEL_OK")
</pallas_src>

<mosaic_0001>
module attributes {stable_mosaic.version = 11 : i64} {
  func.func @_xw_kernel(%arg0: i32, %arg1: memref<64x32xbf16, #tpu.memory_space<vmem>>, %arg2: memref<32x32xbf16, #tpu.memory_space<vmem>>, %arg3: memref<64x32xbf16, #tpu.memory_space<vmem>>) attributes {dimension_semantics = [#tpu.dimension_semantics<parallel>], iteration_bounds = array<i64: 2>, scalar_prefetch = 0 : i64, scratch_operands = 0 : i64, tpu.core_type = #tpu.core_type<tc>, window_params = [{transform_indices = @transform_0, window_bounds = array<i64: 64, 32>}, {pipeline_mode = #tpu.pipeline_mode<synchronous>, transform_indices = @transform_1, window_bounds = array<i64: 32, 32>}, {transform_indices = @transform_2, window_bounds = array<i64: 64, 32>}]} {
    %c0 = arith.constant 0 : index
    %c0_0 = arith.constant 0 : index
    %0 = vector.load %arg1[%c0, %c0_0] : memref<64x32xbf16, #tpu.memory_space<vmem>>, vector<64x32xbf16>
    %c0_1 = arith.constant 0 : index
    %c0_2 = arith.constant 0 : index
    %1 = vector.load %arg2[%c0_1, %c0_2] : memref<32x32xbf16, #tpu.memory_space<vmem>>, vector<32x32xbf16>
    %cst = arith.constant dense<0.000000e+00> : vector<64x32xf32>
    %2 = tpu.matmul %0, %1, %cst {dimension_numbers = #tpu.dot_dimension_numbers<[1], [0], [0], [1], [0, 0, 1, 1], [], []>} : vector<64x32xbf16>, vector<32x32xbf16>, vector<64x32xf32> -> vector<64x32xf32>
    %3 = arith.truncf %2 : vector<64x32xf32> to vector<64x32xbf16>
    %c0_3 = arith.constant 0 : index
    %c0_4 = arith.constant 0 : index
    %4 = vector.load %arg3[%c0_3, %c0_4] : memref<64x32xbf16, #tpu.memory_space<vmem>>, vector<64x32xbf16>
    tpu.vector_store %arg3[%c0_3, %c0_4], %3 {strides = array<i32>} : memref<64x32xbf16, #tpu.memory_space<vmem>>, vector<64x32xbf16>,
    return
  }
  func.func @transform_0(%arg0: i32) -> (i32, i32) {
    %c0_i32 = arith.constant 0 : i32
    %c0_i32_0 = arith.constant 0 : i32
    return %arg0, %c0_i32 : i32, i32
  }
  func.func @transform_1(%arg0: i32) -> (i32, i32) {
    %c0_i32 = arith.constant 0 : i32
    %c0_i32_0 = arith.constant 0 : i32
    %c0_i32_1 = arith.constant 0 : i32
    return %c0_i32, %c0_i32_0 : i32, i32
  }
  func.func @transform_2(%arg0: i32) -> (i32, i32) {
    %c0_i32 = arith.constant 0 : i32
    %c0_i32_0 = arith.constant 0 : i32
    return %arg0, %c0_i32 : i32, i32
  }
}

module attributes {stable_mosaic.version = 11 : i64} {
  func.func @_out_kernel(%arg0: i32, %arg1: i32, %arg2: memref<64x128xi8, #tpu.memory_space<vmem>>, %arg3: memref<128x16xbf16, #tpu.memory_space<vmem>>, %arg4: memref<1x16xf32, #tpu.memory_space<vmem>>, %arg5: memref<64x16xf32, #tpu.memory_space<vmem>>, %arg6: memref<64x16xf32, #tpu.memory_space<vmem>>) attributes {dimension_semantics = [#tpu.dimension_semantics<parallel>, #tpu.dimension_semantics<arbitrary>], iteration_bounds = array<i64: 2, 1>, scalar_prefetch = 0 : i64, scratch_operands = 1 : i64, tpu.core_type = #tpu.core_type<tc>, window_params = [{transform_indices = @transform_0, window_bounds = array<i64: 64, 128>}, {transform_indices = @transform_1, window_bounds = array<i64: 128, 16>}, {pipeline_mode = #tpu.pipeline_mode<synchronous>, transform_indices = @transform_2, window_bounds = array<i64: 1, 16>}, {transform_indices = @transform_3, window_bounds = array<i64: 64, 16>}]} {
    %c0_i32 = arith.constant 0 : i32
    %0 = arith.cmpi eq, %arg1, %c0_i32 : i32
    %1 = arith.extui %0 : i1 to i32
    %c0_i32_0 = arith.constant 0 : i32
    %2 = arith.cmpi ne, %1, %c0_i32_0 : i32
    scf.if %2 {
      %cst_10 = arith.constant 0.000000e+00 : f32
      %14 = vector.broadcast %cst_10 : f32 to vector<64x16xf32>
      %c0_11 = arith.constant 0 : index
      %c0_12 = arith.constant 0 : index
      %15 = vector.load %arg6[%c0_11, %c0_12] : memref<64x16xf32, #tpu.memory_space<vmem>>, vector<64x16xf32>
      tpu.vector_store %arg6[%c0_11, %c0_12], %14 {strides = array<i32>} : memref<64x16xf32, #tpu.memory_space<vmem>>, vector<64x16xf32>,
    } else {
    }
    %c0 = arith.constant 0 : index
    %c0_1 = arith.constant 0 : index
    %3 = vector.load %arg2[%c0, %c0_1] : memref<64x128xi8, #tpu.memory_space<vmem>>, vector<64x128xi8>
    %4 = arith.sitofp %3 : vector<64x128xi8> to vector<64x128xf32>
    %5 = arith.truncf %4 : vector<64x128xf32> to vector<64x128xbf16>
    %c0_2 = arith.constant 0 : index
    %c0_3 = arith.constant 0 : index
    %6 = vector.load %arg6[%c0_2, %c0_3] : memref<64x16xf32, #tpu.memory_space<vmem>>, vector<64x16xf32>
    %c0_4 = arith.constant 0 : index
    %c0_5 = arith.constant 0 : index
    %7 = vector.load %arg3[%c0_4, %c0_5] : memref<128x16xbf16, #tpu.memory_space<vmem>>, vector<128x16xbf16>
    %cst = arith.constant dense<0.000000e+00> : vector<64x16xf32>
    %8 = tpu.matmul %5, %7, %cst {dimension_numbers = #tpu.dot_dimension_numbers<[1], [0], [0], [1], [0, 0, 1, 1], [], []>} : vector<64x128xbf16>, vector<128x16xbf16>, vector<64x16xf32> -> vector<64x16xf32>
    %9 = arith.addf %6, %8 : vector<64x16xf32>
    %c0_6 = arith.constant 0 : index
    %c0_7 = arith.constant 0 : index
    %10 = vector.load %arg6[%c0_6, %c0_7] : memref<64x16xf32, #tpu.memory_space<vmem>>, vector<64x16xf32>
    tpu.vector_store %arg6[%c0_6, %c0_7], %9 {strides = array<i32>} : memref<64x16xf32, #tpu.memory_space<vmem>>, vector<64x16xf32>,
    %c0_i32_8 = arith.constant 0 : i32
    %11 = arith.cmpi eq, %arg1, %c0_i32_8 : i32
    %12 = arith.extui %11 : i1 to i32
    %c0_i32_9 = arith.constant 0 : i32
    %13 = arith.cmpi ne, %12, %c0_i32_9 : i32
    scf.if %13 {
      %c0_10 = arith.constant 0 : index
      %c0_11 = arith.constant 0 : index
      %14 = vector.load %arg6[%c0_10, %c0_11] : memref<64x16xf32, #tpu.memory_space<vmem>>, vector<64x16xf32>
      %c0_12 = arith.constant 0 : index
      %c0_13 = arith.constant 0 : index
      %15 = vector.load %arg4[%c0_12, %c0_13] : memref<1x16xf32, #tpu.memory_space<vmem>>, vector<1x16xf32>
      %16 = vector.broadcast %15 : vector<1x16xf32> to vector<64x16xf32>
      %17 = arith.addf %14, %16 : vector<64x16xf32>
      %c0_14 = arith.constant 0 : index
      %c0_15 = arith.constant 0 : index
      %18 = vector.load %arg5[%c0_14, %c0_15] : memref<64x16xf32, #tpu.memory_space<vmem>>, vector<64x16xf32>
      tpu.vector_store %arg5[%c0_14, %c0_15], %17 {strides = array<i32>} : memref<64x16xf32, #tpu.memory_space<vmem>>, vector<64x16xf32>,
    } else {
    }
    return
  }
  func.func @transform_0(%arg0: i32, %arg1: i32) -> (i32, i32) {
    %c0_i32 = arith.constant 0 : i32
    return %arg0, %arg1 : i32, i32
  }
  func.func @transform_1(%arg0: i32, %arg1: i32) -> (i32, i32) {
    %c0_i32 = arith.constant 0 : i32
    %c0_i32_0 = arith.constant 0 : i32
    return %arg1, %c0_i32 : i32, i32
  }
  func.func @transform_2(%arg0: i32, %arg1: i32) -> (i32, i32) {
    %c0_i32 = arith.constant 0 : i32
    %c0_i32_0 = arith.constant 0 : i32
    %c0_i32_1 = arith.constant 0 : i32
    return %c0_i32, %c0_i32_0 : i32, i32
  }
  func.func @transform_3(%arg0: i32, %arg1: i32) -> (i32, i32) {
    %c0_i32 = arith.constant 0 : i32
    %c0_i32_0 = arith.constant 0 : i32
    return %arg0, %c0_i32 : i32, i32
  }
}

module attributes {stable_mosaic.version = 11 : i64} {
  func.func @_hidden_kernel(%arg0: i32, %arg1: i32, %arg2: memref<64x128xi8, #tpu.memory_space<vmem>>, %arg3: memref<128x32xbf16, #tpu.memory_space<vmem>>, %arg4: memref<1x32xf32, #tpu.memory_space<vmem>>, %arg5: memref<32x16xbf16, #tpu.memory_space<vmem>>, %arg6: memref<64x16xbf16, #tpu.memory_space<vmem>>, %arg7: memref<64x32xf32, #tpu.memory_space<vmem>>) attributes {dimension_semantics = [#tpu.dimension_semantics<parallel>, #tpu.dimension_semantics<arbitrary>], iteration_bounds = array<i64: 2, 1>, scalar_prefetch = 0 : i64, scratch_operands = 1 : i64, tpu.core_type = #tpu.core_type<tc>, window_params = [{transform_indices = @transform_0, window_bounds = array<i64: 64, 128>}, {transform_indices = @transform_1, window_bounds = array<i64: 128, 32>}, {pipeline_mode = #tpu.pipeline_mode<synchronous>, transform_indices = @transform_2, window_bounds = array<i64: 1, 32>}, {pipeline_mode = #tpu.pipeline_mode<synchronous>, transform_indices = @transform_3, window_bounds = array<i64: 32, 16>}, {transform_indices = @transform_4, window_bounds = array<i64: 64, 16>}]} {
    %c0_i32 = arith.constant 0 : i32
    %0 = arith.cmpi eq, %arg1, %c0_i32 : i32
    %1 = arith.extui %0 : i1 to i32
    %c0_i32_0 = arith.constant 0 : i32
    %2 = arith.cmpi ne, %1, %c0_i32_0 : i32
    scf.if %2 {
      %cst_10 = arith.constant 0.000000e+00 : f32
      %14 = vector.broadcast %cst_10 : f32 to vector<64x32xf32>
      %c0_11 = arith.constant 0 : index
      %c0_12 = arith.constant 0 : index
      %15 = vector.load %arg7[%c0_11, %c0_12] : memref<64x32xf32, #tpu.memory_space<vmem>>, vector<64x32xf32>
      tpu.vector_store %arg7[%c0_11, %c0_12], %14 {strides = array<i32>} : memref<64x32xf32, #tpu.memory_space<vmem>>, vector<64x32xf32>,
    } else {
    }
    %c0 = arith.constant 0 : index
    %c0_1 = arith.constant 0 : index
    %3 = vector.load %arg2[%c0, %c0_1] : memref<64x128xi8, #tpu.memory_space<vmem>>, vector<64x128xi8>
    %4 = arith.sitofp %3 : vector<64x128xi8> to vector<64x128xf32>
    %5 = arith.truncf %4 : vector<64x128xf32> to vector<64x128xbf16>
    %c0_2 = arith.constant 0 : index
    %c0_3 = arith.constant 0 : index
    %6 = vector.load %arg7[%c0_2, %c0_3] : memref<64x32xf32, #tpu.memory_space<vmem>>, vector<64x32xf32>
    %c0_4 = arith.constant 0 : index
    %c0_5 = arith.constant 0 : index
    %7 = vector.load %arg3[%c0_4, %c0_5] : memref<128x32xbf16, #tpu.memory_space<vmem>>, vector<128x32xbf16>
    %cst = arith.constant dense<0.000000e+00> : vector<64x32xf32>
    %8 = tpu.matmul %5, %7, %cst {dimension_numbers = #tpu.dot_dimension_numbers<[1], [0], [0], [1], [0, 0, 1, 1], [], []>} : vector<64x128xbf16>, vector<128x32xbf16>, vector<64x32xf32> -> vector<64x32xf32>
    %9 = arith.addf %6, %8 : vector<64x32xf32>
    %c0_6 = arith.constant 0 : index
    %c0_7 = arith.constant 0 : index
    %10 = vector.load %arg7[%c0_6, %c0_7] : memref<64x32xf32, #tpu.memory_space<vmem>>, vector<64x32xf32>
    tpu.vector_store %arg7[%c0_6, %c0_7], %9 {strides = array<i32>} : memref<64x32xf32, #tpu.memory_space<vmem>>, vector<64x32xf32>,
    %c0_i32_8 = arith.constant 0 : i32
    %11 = arith.cmpi eq, %arg1, %c0_i32_8 : i32
    %12 = arith.extui %11 : i1 to i32
    %c0_i32_9 = arith.constant 0 : i32
    %13 = arith.cmpi ne, %12, %c0_i32_9 : i32
    scf.if %13 {
      %c0_10 = arith.constant 0 : index
      %c0_11 = arith.constant 0 : index
      %14 = vector.load %arg7[%c0_10, %c0_11] : memref<64x32xf32, #tpu.memory_space<vmem>>, vector<64x32xf32>
      %c0_12 = arith.constant 0 : index
      %c0_13 = arith.constant 0 : index
      %15 = vector.load %arg4[%c0_12, %c0_13] : memref<1x32xf32, #tpu.memory_space<vmem>>, vector<1x32xf32>
      %16 = vector.broadcast %15 : vector<1x32xf32> to vector<64x32xf32>
      %17 = arith.addf %14, %16 : vector<64x32xf32>
      %cst_14 = arith.constant 0.000000e+00 : f32
      %18 = vector.broadcast %cst_14 : f32 to vector<64x32xf32>
      %19 = arith.maximumf %17, %18 : vector<64x32xf32>
      %20 = arith.truncf %19 : vector<64x32xf32> to vector<64x32xbf16>
      %c0_15 = arith.constant 0 : index
      %c0_16 = arith.constant 0 : index
      %21 = vector.load %arg5[%c0_15, %c0_16] : memref<32x16xbf16, #tpu.memory_space<vmem>>, vector<32x16xbf16>
      %cst_17 = arith.constant dense<0.000000e+00> : vector<64x16xf32>
      %22 = tpu.matmul %20, %21, %cst_17 {dimension_numbers = #tpu.dot_dimension_numbers<[1], [0], [0], [1], [0, 0, 1, 1], [], []>} : vector<64x32xbf16>, vector<32x16xbf16>, vector<64x16xf32> -> vector<64x16xf32>
      %23 = arith.truncf %22 : vector<64x16xf32> to vector<64x16xbf16>
      %c0_18 = arith.constant 0 : index
      %c0_19 = arith.constant 0 : index
      %24 = vector.load %arg6[%c0_18, %c0_19] : memref<64x16xbf16, #tpu.memory_space<vmem>>, vector<64x16xbf16>
      tpu.vector_store %arg6[%c0_18, %c0_19], %23 {strides = array<i32>} : memref<64x16xbf16, #tpu.memory_space<vmem>>, vector<64x16xbf16>,
    } else {
    }
    return
  }
  func.func @transform_0(%arg0: i32, %arg1: i32) -> (i32, i32) {
    %c0_i32 = arith.constant 0 : i32
    return %arg0, %arg1 : i32, i32
  }
  func.func @transform_1(%arg0: i32, %arg1: i32) -> (i32, i32) {
    %c0_i32 = arith.constant 0 : i32
    %c0_i32_0 = arith.constant 0 : i32
    return %arg1, %c0_i32 : i32, i32
  }
  func.func @transform_2(%arg0: i32, %arg1: i32) -> (i32, i32) {
    %c0_i32 = arith.constant 0 : i32
    %c0_i32_0 = arith.constant 0 : i32
    %c0_i32_1 = arith.constant 0 : i32
    return %c0_i32, %c0_i32_0 : i32, i32
  }
  func.func @transform_3(%arg0: i32, %arg1: i32) -> (i32, i32) {
    %c0_i32 = arith.constant 0 : i32
    %c0_i32_0 = arith.constant 0 : i32
    %c0_i32_1 = arith.constant 0 : i32
    return %c0_i32, %c0_i32_0 : i32, i32
  }
  func.func @transform_4(%arg0: i32, %arg1: i32) -> (i32, i32) {
    %c0_i32 = arith.constant 0 : i32
    %c0_i32_0 = arith.constant 0 : i32
    return %arg0, %c0_i32 : i32, i32
  }
}

module attributes {stable_mosaic.version = 11 : i64} {
  func.func @kernel(%arg0: i32, %arg1: memref<64x16xf32, #tpu.memory_space<vmem>>, %arg2: memref<16x8xf32, #tpu.memory_space<vmem>>, %arg3: memref<16x8xf32, #tpu.memory_space<vmem>>, %arg4: memref<16x8xf32, #tpu.memory_space<vmem>>, %arg5: memref<1x8xf32, #tpu.memory_space<vmem>>) attributes {dimension_semantics = [#tpu.dimension_semantics<arbitrary>], iteration_bounds = array<i64: 1>, scalar_prefetch = 0 : i64, scratch_operands = 2 : i64, tpu.core_type = #tpu.core_type<tc>, window_params = [{transform_indices = @transform_0, window_bounds = array<i64: 64, 16>}, {pipeline_mode = #tpu.pipeline_mode<synchronous>, transform_indices = @transform_1, window_bounds = array<i64: 16, 8>}, {pipeline_mode = #tpu.pipeline_mode<synchronous>, transform_indices = @transform_2, window_bounds = array<i64: 16, 8>}]} {
    %c0_i32 = arith.constant 0 : i32
    %0 = arith.cmpi eq, %arg0, %c0_i32 : i32
    %1 = arith.extui %0 : i1 to i32
    %c0_i32_0 = arith.constant 0 : i32
    %2 = arith.cmpi ne, %1, %c0_i32_0 : i32
    scf.if %2 {
      %cst_23 = arith.constant 0.000000e+00 : f32
      %48 = vector.broadcast %cst_23 : f32 to vector<16x8xf32>
      %c0_24 = arith.constant 0 : index
      %c0_25 = arith.constant 0 : index
      %49 = vector.load %arg4[%c0_24, %c0_25] : memref<16x8xf32, #tpu.memory_space<vmem>>, vector<16x8xf32>
      tpu.vector_store %arg4[%c0_24, %c0_25], %48 {strides = array<i32>} : memref<16x8xf32, #tpu.memory_space<vmem>>, vector<16x8xf32>,
      %cst_26 = arith.constant 0.000000e+00 : f32
      %50 = vector.broadcast %cst_26 : f32 to vector<1x8xf32>
      %c0_27 = arith.constant 0 : index
      %c0_28 = arith.constant 0 : index
      %51 = vector.load %arg5[%c0_27, %c0_28] : memref<1x8xf32, #tpu.memory_space<vmem>>, vector<1x8xf32>
      tpu.vector_store %arg5[%c0_27, %c0_28], %50 {strides = array<i32>} : memref<1x8xf32, #tpu.memory_space<vmem>>, vector<1x8xf32>,
    } else {
    }
    %c0 = arith.constant 0 : index
    %c0_1 = arith.constant 0 : index
    %3 = vector.load %arg1[%c0, %c0_1] : memref<64x16xf32, #tpu.memory_space<vmem>>, vector<64x16xf32>
    %4 = arith.mulf %3, %3 : vector<64x16xf32>
    %cst = arith.constant dense<0.000000e+00> : vector<64xf32>
    %5 = vector.multi_reduction <add>, %4, %cst [1] : vector<64x16xf32> to vector<64xf32>
    %6 = vector.shape_cast %5 : vector<64xf32> to vector<64x1xf32>
    %cst_2 = arith.constant 1.000000e-24 : f32
    %7 = vector.broadcast %cst_2 : f32 to vector<64x1xf32>
    %8 = arith.maximumf %6, %7 : vector<64x1xf32>
    %9 = math.rsqrt %8 : vector<64x1xf32>
    %10 = vector.broadcast %9 : vector<64x1xf32> to vector<64x16xf32>
    %11 = arith.mulf %3, %10 : vector<64x16xf32>
    %c0_3 = arith.constant 0 : index
    %c0_4 = arith.constant 0 : index
    %12 = vector.load %arg2[%c0_3, %c0_4] : memref<16x8xf32, #tpu.memory_space<vmem>>, vector<16x8xf32>
    %cst_5 = arith.constant dense<0.000000e+00> : vector<64x8xf32>
    %13 = tpu.matmul %11, %12, %cst_5 {dimension_numbers = #tpu.dot_dimension_numbers<[1], [0], [0], [1], [0, 0, 1, 1], [], []>} : vector<64x16xf32>, vector<16x8xf32>, vector<64x8xf32> -> vector<64x8xf32>
    %cst_6 = arith.constant 5.000000e+00 : f32
    %14 = vector.broadcast %cst_6 : f32 to vector<64x8xf32>
    %15 = arith.mulf %14, %13 : vector<64x8xf32>
    %cst_7 = arith.constant dense<0xFF800000> : vector<64xf32>
    %16 = vector.multi_reduction <maximumf>, %15, %cst_7 [1] : vector<64x8xf32> to vector<64xf32>
    %17 = vector.shape_cast %16 : vector<64xf32> to vector<64x1xf32>
    %18 = vector.broadcast %17 : vector<64x1xf32> to vector<64x8xf32>
    %19 = arith.subf %15, %18 : vector<64x8xf32>
    %20 = math.exp %19 : vector<64x8xf32>
    %cst_8 = arith.constant dense<0.000000e+00> : vector<64xf32>
    %21 = vector.multi_reduction <add>, %20, %cst_8 [1] : vector<64x8xf32> to vector<64xf32>
    %22 = vector.shape_cast %21 : vector<64xf32> to vector<64x1xf32>
    %23 = tpu.reciprocal %22 {approx = true} : vector<64x1xf32> -> vector<64x1xf32>
    %24 = vector.broadcast %23 : vector<64x1xf32> to vector<64x8xf32>
    %25 = arith.mulf %20, %24 : vector<64x8xf32>
    %26 = tpu.iota {dimensions = array<i32: 0>} : vector<64x1xi32>
    %c64_i32 = arith.constant 64 : i32
    %27 = arith.muli %arg0, %c64_i32 : i32
    %28 = vector.broadcast %27 : i32 to vector<64x1xi32>
    %29 = arith.addi %26, %28 : vector<64x1xi32>
    %c64_i32_9 = arith.constant 64 : i32
    %30 = vector.broadcast %c64_i32_9 : i32 to vector<64x1xi32>
    %31 = arith.cmpi slt, %29, %30 : vector<64x1xi32>
    %cst_10 = arith.constant 0.000000e+00 : f32
    %32 = vector.shape_cast %31 : vector<64x1xi1> to vector<64x1xi1>
    %33 = vector.broadcast %32 : vector<64x1xi1> to vector<64x8xi1>
    %34 = vector.broadcast %cst_10 : f32 to vector<64x8xf32>
    %35 = arith.select %33, %25, %34 : vector<64x8xi1>, vector<64x8xf32>
    %c0_11 = arith.constant 0 : index
    %c0_12 = arith.constant 0 : index
    %36 = vector.load %arg4[%c0_11, %c0_12] : memref<16x8xf32, #tpu.memory_space<vmem>>, vector<16x8xf32>
    %cst_13 = arith.constant dense<0.000000e+00> : vector<16x8xf32>
    %37 = tpu.matmul %11, %35, %cst_13 {dimension_numbers = #tpu.dot_dimension_numbers<[0], [0], [1], [1], [0, 1, 1, 1], [], []>} : vector<64x16xf32>, vector<64x8xf32>, vector<16x8xf32> -> vector<16x8xf32>
    %38 = arith.addf %36, %37 : vector<16x8xf32>
    %c0_14 = arith.constant 0 : index
    %c0_15 = arith.constant 0 : index
    %39 = vector.load %arg4[%c0_14, %c0_15] : memref<16x8xf32, #tpu.memory_space<vmem>>, vector<16x8xf32>
    tpu.vector_store %arg4[%c0_14, %c0_15], %38 {strides = array<i32>} : memref<16x8xf32, #tpu.memory_space<vmem>>, vector<16x8xf32>,
    %c0_16 = arith.constant 0 : index
    %c0_17 = arith.constant 0 : index
    %40 = vector.load %arg5[%c0_16, %c0_17] : memref<1x8xf32, #tpu.memory_space<vmem>>, vector<1x8xf32>
    %cst_18 = arith.constant dense<0.000000e+00> : vector<8xf32>
    %41 = vector.multi_reduction <add>, %35, %cst_18 [0] : vector<64x8xf32> to vector<8xf32>
    %42 = vector.shape_cast %41 : vector<8xf32> to vector<1x8xf32>
    %43 = arith.addf %40, %42 : vector<1x8xf32>
    %c0_19 = arith.constant 0 : index
    %c0_20 = arith.constant 0 : index
    %44 = vector.load %arg5[%c0_19, %c0_20] : memref<1x8xf32, #tpu.memory_space<vmem>>, vector<1x8xf32>
    tpu.vector_store %arg5[%c0_19, %c0_20], %43 {strides = array<i32>} : memref<1x8xf32, #tpu.memory_space<vmem>>, vector<1x8xf32>,
    %c0_i32_21 = arith.constant 0 : i32
    %45 = arith.cmpi eq, %arg0, %c0_i32_21 : i32
    %46 = arith.extui %45 : i1 to i32
    %c0_i32_22 = arith.constant 0 : i32
    %47 = arith.cmpi ne, %46, %c0_i32_22 : i32
    scf.if %47 {
      %c0_23 = arith.constant 0 : index
      %c0_24 = arith.constant 0 : index
      %48 = vector.load %arg5[%c0_23, %c0_24] : memref<1x8xf32, #tpu.memory_space<vmem>>, vector<1x8xf32>
      %cst_25 = arith.constant 9.99999968E-21 : f32
      %49 = vector.broadcast %cst_25 : f32 to vector<1x8xf32>
      %50 = arith.maximumf %48, %49 : vector<1x8xf32>
      %51 = tpu.reciprocal %50 {approx = true} : vector<1x8xf32> -> vector<1x8xf32>
      %c0_26 = arith.constant 0 : index
      %c0_27 = arith.constant 0 : index
      %52 = vector.load %arg4[%c0_26, %c0_27] : memref<16x8xf32, #tpu.memory_space<vmem>>, vector<16x8xf32>
      %53 = vector.broadcast %51 : vector<1x8xf32> to vector<16x8xf32>
      %54 = arith.mulf %52, %53 : vector<16x8xf32>
      %c0_28 = arith.constant 0 : index
      %c0_29 = arith.constant 0 : index
      %55 = vector.load %arg3[%c0_28, %c0_29] : memref<16x8xf32, #tpu.memory_space<vmem>>, vector<16x8xf32>
      tpu.vector_store %arg3[%c0_28, %c0_29], %54 {strides = array<i32>} : memref<16x8xf32, #tpu.memory_space<vmem>>, vector<16x8xf32>,
    } else {
    }
    return
  }
  func.func @transform_0(%arg0: i32) -> (i32, i32) {
    %c0_i32 = arith.constant 0 : i32
    %c0_i32_0 = arith.constant 0 : i32
    return %arg0, %c0_i32 : i32, i32
  }
  func.func @transform_1(%arg0: i32) -> (i32, i32) {
    %c0_i32 = arith.constant 0 : i32
    %c0_i32_0 = arith.constant 0 : i32
    %c0_i32_1 = arith.constant 0 : i32
    return %c0_i32, %c0_i32_0 : i32, i32
  }
  func.func @transform_2(%arg0: i32) -> (i32, i32) {
    %c0_i32 = arith.constant 0 : i32
    %c0_i32_0 = arith.constant 0 : i32
    %c0_i32_1 = arith.constant 0 : i32
    return %c0_i32, %c0_i32_0 : i32, i32
  }
}

module attributes {stable_mosaic.version = 11 : i64} {
  func.func @kernel(%arg0: i32, %arg1: memref<64x16xf32, #tpu.memory_space<vmem>>, %arg2: memref<16x8xf32, #tpu.memory_space<vmem>>, %arg3: memref<64x8xf32, #tpu.memory_space<vmem>>, %arg4: memref<64x8xf32, #tpu.memory_space<vmem>>) attributes {dimension_semantics = [#tpu.dimension_semantics<parallel>], iteration_bounds = array<i64: 1>, scalar_prefetch = 0 : i64, scratch_operands = 0 : i64, tpu.core_type = #tpu.core_type<tc>, window_params = [{transform_indices = @transform_0, window_bounds = array<i64: 64, 16>}, {pipeline_mode = #tpu.pipeline_mode<synchronous>, transform_indices = @transform_1, window_bounds = array<i64: 16, 8>}, {transform_indices = @transform_2, window_bounds = array<i64: 64, 8>}, {transform_indices = @transform_3, window_bounds = array<i64: 64, 8>}]} {
    %c0 = arith.constant 0 : index
    %c0_0 = arith.constant 0 : index
    %0 = vector.load %arg1[%c0, %c0_0] : memref<64x16xf32, #tpu.memory_space<vmem>>, vector<64x16xf32>
    %1 = arith.mulf %0, %0 : vector<64x16xf32>
    %cst = arith.constant dense<0.000000e+00> : vector<64xf32>
    %2 = vector.multi_reduction <add>, %1, %cst [1] : vector<64x16xf32> to vector<64xf32>
    %3 = vector.shape_cast %2 : vector<64xf32> to vector<64x1xf32>
    %cst_1 = arith.constant 1.000000e-24 : f32
    %4 = vector.broadcast %cst_1 : f32 to vector<64x1xf32>
    %5 = arith.maximumf %3, %4 : vector<64x1xf32>
    %6 = math.rsqrt %5 : vector<64x1xf32>
    %7 = vector.broadcast %6 : vector<64x1xf32> to vector<64x16xf32>
    %8 = arith.mulf %0, %7 : vector<64x16xf32>
    %c0_2 = arith.constant 0 : index
    %c0_3 = arith.constant 0 : index
    %9 = vector.load %arg2[%c0_2, %c0_3] : memref<16x8xf32, #tpu.memory_space<vmem>>, vector<16x8xf32>
    %cst_4 = arith.constant dense<0.000000e+00> : vector<64x8xf32>
    %10 = tpu.matmul %8, %9, %cst_4 {dimension_numbers = #tpu.dot_dimension_numbers<[1], [0], [0], [1], [0, 0, 1, 1], [], []>} : vector<64x16xf32>, vector<16x8xf32>, vector<64x8xf32> -> vector<64x8xf32>
    %cst_5 = arith.constant 5.000000e+00 : f32
    %11 = vector.broadcast %cst_5 : f32 to vector<64x8xf32>
    %12 = arith.mulf %11, %10 : vector<64x8xf32>
    %cst_6 = arith.constant dense<0xFF800000> : vector<64xf32>
    %13 = vector.multi_reduction <maximumf>, %12, %cst_6 [1] : vector<64x8xf32> to vector<64xf32>
    %14 = vector.shape_cast %13 : vector<64xf32> to vector<64x1xf32>
    %15 = vector.broadcast %14 : vector<64x1xf32> to vector<64x8xf32>
    %16 = arith.subf %12, %15 : vector<64x8xf32>
    %17 = math.exp %16 : vector<64x8xf32>
    %cst_7 = arith.constant dense<0.000000e+00> : vector<64xf32>
    %18 = vector.multi_reduction <add>, %17, %cst_7 [1] : vector<64x8xf32> to vector<64xf32>
    %19 = vector.shape_cast %18 : vector<64xf32> to vector<64x1xf32>
    %20 = tpu.reciprocal %19 {approx = true} : vector<64x1xf32> -> vector<64x1xf32>
    %21 = vector.broadcast %20 : vector<64x1xf32> to vector<64x8xf32>
    %22 = arith.mulf %17, %21 : vector<64x8xf32>
    %c0_8 = arith.constant 0 : index
    %c0_9 = arith.constant 0 : index
    %23 = vector.load %arg3[%c0_8, %c0_9] : memref<64x8xf32, #tpu.memory_space<vmem>>, vector<64x8xf32>
    tpu.vector_store %arg3[%c0_8, %c0_9], %22 {strides = array<i32>} : memref<64x8xf32, #tpu.memory_space<vmem>>, vector<64x8xf32>,
    %c0_10 = arith.constant 0 : index
    %c0_11 = arith.constant 0 : index
    %24 = vector.load %arg4[%c0_10, %c0_11] : memref<64x8xf32, #tpu.memory_space<vmem>>, vector<64x8xf32>
    tpu.vector_store %arg4[%c0_10, %c0_11], %10 {strides = array<i32>} : memref<64x8xf32, #tpu.memory_space<vmem>>, vector<64x8xf32>,
    return
  }
  func.func @transform_0(%arg0: i32) -> (i32, i32) {
    %c0_i32 = arith.constant 0 : i32
    %c0_i32_0 = arith.constant 0 : i32
    return %arg0, %c0_i32 : i32, i32
  }
  func.func @transform_1(%arg0: i32) -> (i32, i32) {
    %c0_i32 = arith.constant 0 : i32
    %c0_i32_0 = arith.constant 0 : i32
    %c0_i32_1 = arith.constant 0 : i32
    return %c0_i32, %c0_i32_0 : i32, i32
  }
  func.func @transform_2(%arg0: i32) -> (i32, i32) {
    %c0_i32 = arith.constant 0 : i32
    %c0_i32_0 = arith.constant 0 : i32
    return %arg0, %c0_i32 : i32, i32
  }
  func.func @transform_3(%arg0: i32) -> (i32, i32) {
    %c0_i32 = arith.constant 0 : i32
    %c0_i32_0 = arith.constant 0 : i32
    return %arg0, %c0_i32 : i32, i32
  }
}

</mosaic_0001>

<llo_original>
// kernel: gcn_clusternet_forward.8
$region0: #{gcn_clusternet_forward.8}
  #allocation0 [shape = 'u32[]', space=smem, size = 0x4, offset = 0x4, fixed_abs, tag = 'smem constant byte address 0x4 - core index']
  #allocation1 [shape = 'u32[144,128]{1,0:T(1,128)}', space=vmem, size = 0x12000, scoped, tag = 'internal scratch']
  #allocation2 [shape = 'f32[64,16]{1,0:T(8,128)}', space=vmem, size = 0x8000, scoped, tag = 'scratch operand']
  %s0 = inlined_call_operand.vmem [shape: s8[128,128], index: 0, kind: input, shape index: {}]
  %s1 = inlined_call_operand.vmem [shape: bf16[128,16], index: 1, kind: input, shape index: {}]
  %s2 = inlined_call_operand.vmem [shape: f32[1,16], index: 2, kind: input, shape index: {}]
  %s3 = inlined_call_operand.vmem [shape: f32[128,16], index: 3, kind: output, shape index: {}]
  %s4 = sld [smem:[#allocation0]]
  $region53: #{gcn_clusternet_forward.8} parent=0
    _
  %s6 = ssub.s32 1, %s4
  %s7 = scalar_select 0, %s6, %s4
  loop: start=0, step=1, limit=4
  $region2: #{gcn_clusternet_forward.8} parent=0 // loop_pre_header
    _
  $region3: #{gcn_clusternet_forward.8} parent=0 // loop_header
    %s9 = sphi 0, %s13
    %p10 = scmp.ge.s32.totalorder %s9, 4
    %s16 = sphi 0, %s28
    %s17 = sphi 0, %s24
    %s18 = sphi 0, %s16
    %s19 = sphi 0, %s17
    %s20 = sphi 0, %s18
    %s21 = sphi 0, %s19
    %s33 = sphi 0, %s35
    %s36 = sphi 0, %s33
    %s37 = sphi 0, %s36
    %s53 = sphi 0, %s37
    %s59 = sphi 0, %s61
    %s62 = sphi 0, %s59
    %s63 = sphi 0, %s62
    %s79 = sphi 0, %s63
    %s83 = sphi 0, %s83
    %s85 = sphi 0, %s83
    %s86 = sphi 0, %s85
    %s100 = sphi 0, %s86
    %s106 = sphi 0, %s108
    %s109 = sphi 0, %s106
    %s110 = sphi 0, %s109
    %s126 = sphi 0, %s110
  $region4: #{gcn_clusternet_forward.8} parent=0 // loop_header_branch
    %12 = sbr.rel (%p10) target = $region8
  $region5: #{gcn_clusternet_forward.8} parent=0 // loop_body
    %s14 = ssub.s32 %s9, 1
    %s15 = ssub.s32 %s9, 2
    %s22 = sadd.s32 1, %s17
    %p23 = scmp.ge.s32.totalorder %s22, 1
    %s24 = scalar_select %p23, 0, %s22
    %s25 = sadd.s32 1, %s16
    %s26 = scalar_select %p23, %s25, %s16
    %p27 = scmp.ge.s32.totalorder %s26, 2
    %s28 = scalar_select %p27, 0, %s26
    %s29 = ssub.s32 %s16, %s28
    %s30 = ssub.s32 %s17, %s24
    %s31 = sor.u32 %s29, %s30
    %p32 = scmp.eq.s32.totalorder %s31, 0
    %s34 = sadd.s32 %s33, 1
    %s35 = scalar_select %p32, %s33, %s34
    %p38 = pneg %p32
    %p39 = scmp.eq.s32.totalorder %s9, 1
    %p40 = por %p38, %p39
    %p41 = scmp.ne.s32.totalorder %s33, %s36
    %p42 = scmp.eq.s32.totalorder %s9, 0
    %p43 = por %p41, %p42
    %p44 = scmp.ne.s32.totalorder %s33, %s36
    %p45 = scmp.eq.s32.totalorder %s14, 1
    %p46 = por %p44, %p45
    %p47 = scmp.ne.s32.totalorder %s36, %s37
    %p48 = scmp.eq.s32.totalorder %s14, 0
    %p49 = por %p47, %p48
    %p50 = scmp.ne.s32.totalorder %s36, %s37
    %p51 = scmp.eq.s32.totalorder %s15, 1
    %p52 = por %p50, %p51
    %p54 = scmp.ne.s32.totalorder %s37, %s53
    %p55 = scmp.eq.s32.totalorder %s15, 0
    %p56 = por %p54, %p55
    %s57 = ssub.s32 %s17, %s24
    %p58 = scmp.eq.s32.totalorder %s57, 0
    %s60 = sadd.s32 %s59, 1
    %s61 = scalar_select %p58, %s59, %s60
    %p64 = pneg %p58
    %p65 = scmp.eq.s32.totalorder %s9, 1
    %p66 = por %p64, %p65
    %p67 = scmp.ne.s32.totalorder %s59, %s62
    %p68 = scmp.eq.s32.totalorder %s9, 0
    %p69 = por %p67, %p68
    %p70 = scmp.ne.s32.totalorder %s59, %s62
    %p71 = scmp.eq.s32.totalorder %s14, 1
    %p72 = por %p70, %p71
    %p73 = scmp.ne.s32.totalorder %s62, %s63
    %p74 = scmp.eq.s32.totalorder %s14, 0
    %p75 = por %p73, %p74
    %p76 = scmp.ne.s32.totalorder %s62, %s63
    %p77 = scmp.eq.s32.totalorder %s15, 1
    %p78 = por %p76, %p77
    %p80 = scmp.ne.s32.totalorder %s63, %s79
    %p81 = scmp.eq.s32.totalorder %s15, 0
    %p82 = por %p80, %p81
    %s84 = sadd.s32 %s83, 1
    %p87 = scmp.eq.s32.totalorder %s9, 1
    %p88 = scmp.ne.s32.totalorder %s83, %s85
    %p89 = scmp.eq.s32.totalorder %s9, 0
    %p90 = por %p88, %p89
    %p91 = scmp.ne.s32.totalorder %s83, %s85
    %p92 = scmp.eq.s32.totalorder %s14, 1
    %p93 = por %p91, %p92
    %p94 = scmp.ne.s32.totalorder %s85, %s86
    %p95 = scmp.eq.s32.totalorder %s14, 0
    %p96 = por %p94, %p95
    %p97 = scmp.ne.s32.totalorder %s85, %s86
    %p98 = scmp.eq.s32.totalorder %s15, 1
    %p99 = por %p97, %p98
    %p101 = scmp.ne.s32.totalorder %s86, %s100
    %p102 = scmp.eq.s32.totalorder %s15, 0
    %p103 = por %p101, %p102
    %s104 = ssub.s32 %s16, %s28
    %p105 = scmp.eq.s32.totalorder %s104, 0
    %s107 = sadd.s32 %s106, 1
    %s108 = scalar_select %p105, %s106, %s107
    %p111 = pneg %p105
    %p112 = scmp.eq.s32.totalorder %s9, 1
    %p113 = por %p111, %p112
    %p114 = scmp.ne.s32.totalorder %s106, %s109
    %p115 = scmp.eq.s32.totalorder %s9, 0
    %p116 = por %p114, %p115
    %p117 = scmp.ne.s32.totalorder %s106, %s109
    %p118 = scmp.eq.s32.totalorder %s14, 1
    %p119 = por %p117, %p118
    %p120 = scmp.ne.s32.totalorder %s109, %s110
    %p121 = scmp.eq.s32.totalorder %s14, 0
    %p122 = por %p120, %p121
    %p123 = scmp.ne.s32.totalorder %s109, %s110
    %p124 = scmp.eq.s32.totalorder %s15, 1
    %p125 = por %p123, %p124
    %p127 = scmp.ne.s32.totalorder %s110, %s126
    %p128 = scmp.eq.s32.totalorder %s15, 0
    %p129 = por %p127, %p128
    %p130 = scmp.le.s32.totalorder 1, %s9
    %p131 = scmp.lt.s32.totalorder %s9, 3
    %p132 = pnand %p130, %p131
    %p133 = pneg %p132
    // Predicated region
    $region9: #{gcn_clusternet_forward.8} parent=5 // pred_check
      _
    $region10: #{gcn_clusternet_forward.8} parent=5 // pred_check_branch
      %135 = sbr.rel (%p132) target = $region12
    $region11: #{gcn_clusternet_forward.8} parent=5 // pred_region
      %s136 = ssub.s32 %s9, 1
      // Predicated region
      $region13: #{gcn_clusternet_forward.8} parent=11 // pred_check
        %p137 = pneg %p75
      $region14: #{gcn_clusternet_forward.8} parent=11 // pred_check_branch
        %139 = sbr.rel (%p137) target = $region16
      $region15: #{gcn_clusternet_forward.8} parent=11 // pred_region
        %s140 = smul.u32 16, %s19
        %p141 = scmp.lt.s32.totalorder %s140, 15
        %s142 = scalar_select %p141, %s140, 15
        %s143 = smul.addr %s142, 4
        %s144 = scalar_lea.vmem %s1, %s143
        %s145 = smul.u32 16, %s19
      $region16: #{gcn_clusternet_forward.8} parent=11 // pred_fallthru
        _
      // Predicated region
      $region17: #{gcn_clusternet_forward.8} parent=11 // pred_check
        %p146 = pneg %p96
      $region18: #{gcn_clusternet_forward.8} parent=11 // pred_check_branch
        %148 = sbr.rel (%p146) target = $region20
      $region19: #{gcn_clusternet_forward.8} parent=11 // pred_region
        _
      $region20: #{gcn_clusternet_forward.8} parent=11 // pred_fallthru
        _
    $region12: #{gcn_clusternet_forward.8} parent=5 // pred_fallthru
      _
    %p149 = scmp.lt.s32.totalorder %s9, 2
    // Predicated region
    $region21: #{gcn_clusternet_forward.8} parent=5 // pred_check
      %p150 = pneg %p149
    $region22: #{gcn_clusternet_forward.8} parent=5 // pred_check_branch
      %152 = sbr.rel (%p150) target = $region24
    $region23: #{gcn_clusternet_forward.8} parent=5 // pred_region
      // Predicated region
      $region25: #{gcn_clusternet_forward.8} parent=23 // pred_check
        %p153 = pneg %p43
      $region26: #{gcn_clusternet_forward.8} parent=23 // pred_check_branch
        %155 = sbr.rel (%p153) target = $region28
      $region27: #{gcn_clusternet_forward.8} parent=23 // pred_region
        %s156 = smul.u32 2, %s16
        %p157 = scmp.lt.s32.totalorder %s156, 3
        %s158 = scalar_select %p157, %s156, 3
        %p159 = scmp.lt.s32.totalorder %s17, 0
        %s160 = scalar_select %p159, %s17, 0
        %s161 = sadd.s32 %s160, %s158
        %s162 = smul.addr %s161, 8
        %s163 = scalar_lea.vmem %s0, %s162
        %s164 = smul.u32 2, %s16
      $region28: #{gcn_clusternet_forward.8} parent=23 // pred_fallthru
        _
    $region24: #{gcn_clusternet_forward.8} parent=5 // pred_fallthru
      _
    %p165 = scmp.le.s32.totalorder 1, %s9
    %p166 = scmp.lt.s32.totalorder %s9, 3
    %p167 = pnand %p165, %p166
    %p168 = pneg %p167
    // Predicated region
    $region29: #{gcn_clusternet_forward.8} parent=5 // pred_check
      _
    $region30: #{gcn_clusternet_forward.8} parent=5 // pred_check_branch
      %170 = sbr.rel (%p167) target = $region32
    $region31: #{gcn_clusternet_forward.8} parent=5 // pred_region
      %s171 = ssub.s32 %s9, 1
      %s172 = smul.u32 2, %s18
      %p173 = scmp.lt.s32.totalorder %s172, 3
      %s174 = scalar_select %p173, %s172, 3
      %p175 = scmp.lt.s32.totalorder %s19, 0
      %s176 = scalar_select %p175, %s19, 0
      %s177 = sadd.s32 %s176, %s174
      %s178 = smul.addr %s177, 8
      %s179 = scalar_lea.vmem %s0, %s178
      %p180 = pneg %p49
      %p181 = pneg %p46
      %s182 = smul.u32 16, %s19
      %p183 = scmp.lt.s32.totalorder %s182, 15
      %s184 = scalar_select %p183, %s182, 15
      %s185 = smul.addr %s184, 4
      %s186 = scalar_lea.vmem %s1, %s185
      %p187 = pneg %p75
      %p188 = pneg %p72
      %p189 = pneg %p96
      %p190 = pneg %p93
      %p191 = pneg %p122
      %p192 = pneg %p119
      %s193 = smul.u32 8, %s18
      %p194 = scmp.lt.s32.totalorder %s193, 15
      %s195 = scalar_select %p194, %s193, 15
      %s196 = smul.addr %s195, 8
      %s197 = scalar_lea.vmem %s3, %s196
      %s198 = smul.u32 2, %s18
      %p199 = scmp.lt.s32.totalorder %s198, 3
      %s200 = scalar_select %p199, %s198, 3
      %p201 = scmp.lt.s32.totalorder %s19, 0
      %s202 = scalar_select %p201, %s19, 0
      %s203 = sadd.s32 %s202, %s200
      %s204 = smul.addr %s203, 8
      %s205 = scalar_lea.vmem %s0, %s204
      %s206 = smul.u32 2, %s18
      %s207 = smul.u32 16, %s19
      %p208 = scmp.lt.s32.totalorder %s207, 15
      %s209 = scalar_select %p208, %s207, 15
      %s210 = smul.addr %s209, 4
      %s211 = scalar_lea.vmem %s1, %s210
      %s212 = smul.u32 16, %s19
      %s213 = smul.u32 8, %s18
      %p214 = scmp.lt.s32.totalorder %s213, 15
      %s215 = scalar_select %p214, %s213, 15
      %s216 = smul.addr %s215, 8
      %s217 = scalar_lea.vmem %s3, %s216
      %s218 = smul.u32 8, %s18
      %p220 = scmp.eq.s32.totalorder %s19, 0
      // Predicated region
      $region33: #{gcn_clusternet_forward.8} parent=31 // pred_check
        %p221 = pneg %p220
      $region34: #{gcn_clusternet_forward.8} parent=31 // pred_check_branch
        %223 = sbr.rel (%p221) target = $region36
      $region35: #{gcn_clusternet_forward.8} parent=31 // pred_region
        %vm224 = vcmask 130048
        %225 = vst.msk [vmem:[#allocation2] sm:$0xff] %vm224, 0.0
        %226 = vst.msk [vmem:[#allocation2 + $0x8] sm:$0xff] %vm224, 0.0
        %227 = vst.msk [vmem:[#allocation2 + $0x10] sm:$0xff] %vm224, 0.0
        %228 = vst.msk [vmem:[#allocation2 + $0x18] sm:$0xff] %vm224, 0.0
        %229 = vst.msk [vmem:[#allocation2 + $0x20] sm:$0xff] %vm224, 0.0
        %230 = vst.msk [vmem:[#allocation2 + $0x28] sm:$0xff] %vm224, 0.0
        %231 = vst.msk [vmem:[#allocation2 + $0x30] sm:$0xff] %vm224, 0.0
        %232 = vst.msk [vmem:[#allocation2 + $0x38] sm:$0xff] %vm224, 0.0
      $region36: #{gcn_clusternet_forward.8} parent=31 // pred_fallthru
        _
      %v233 = vld [vmem:[%s205] sm:$0xff]
      %v234 = vld [vmem:[%s205 + $0x8] sm:$0xff]
      %v235 = vunpack.c.l.s8.bf16 %v233
      %v236 = vunpack.c.h.s8.bf16 %v233
      %v237 = vunpack.c.l.s8.bf16 %v234
      %v238 = vunpack.c.h.s8.bf16 %v234
      %v239 = vld [vmem:[#allocation2] sm:$0xff]
      %v240 = vld [vmem:[#allocation2 + $0x8] sm:$0xff]
      %v241 = vld [vmem:[#allocation2 + $0x10] sm:$0xff]
      %v242 = vld [vmem:[#allocation2 + $0x18] sm:$0xff]
      %v243 = vld [vmem:[#allocation2 + $0x20] sm:$0xff]
      %v244 = vld [vmem:[#allocation2 + $0x28] sm:$0xff]
      %v245 = vld [vmem:[#allocation2 + $0x30] sm:$0xff]
      %v246 = vld [vmem:[#allocation2 + $0x38] sm:$0xff]
      %v247 = vld [vmem:[%s211] sm:$0xf]
      %v248 = vld [vmem:[%s211 + $0x4] sm:$0xf]
      %v249 = vld [vmem:[%s211 + $0x8] sm:$0xf]
      %v250 = vld [vmem:[%s211 + $0xc] sm:$0xf]
      %v251 = vld [vmem:[%s211 + $0x10] sm:$0xf]
      %v252 = vld [vmem:[%s211 + $0x14] sm:$0xf]
      %v253 = vld [vmem:[%s211 + $0x18] sm:$0xf]
      %v254 = vld [vmem:[%s211 + $0x1c] sm:$0xf]
      %v255 = vld [vmem:[%s211 + $0x20] sm:$0xf]
      %v256 = vld [vmem:[%s211 + $0x24] sm:$0xf]
      %v257 = vld [vmem:[%s211 + $0x28] sm:$0xf]
      %v258 = vld [vmem:[%s211 + $0x2c] sm:$0xf]
      %v259 = vld [vmem:[%s211 + $0x30] sm:$0xf]
      %v260 = vld [vmem:[%s211 + $0x34] sm:$0xf]
      %v261 = vld [vmem:[%s211 + $0x38] sm:$0xf]
      %v262 = vld [vmem:[%s211 + $0x3c] sm:$0xf]
      %v279 = vunpack.c.l.b16 %v247
      %v280 = vunpack.c.l.b16 %v248
      %v281 = vunpack.c.l.b16 %v249
      %v282 = vunpack.c.l.b16 %v250
      %v283 = vunpack.c.l.b16 %v251
      %v284 = vunpack.c.l.b16 %v252
      %v285 = vunpack.c.l.b16 %v253
      %v286 = vunpack.c.l.b16 %v254
      %v287 = vunpack.c.l.b16 %v255
      %v288 = vunpack.c.l.b16 %v256
      %v289 = vunpack.c.l.b16 %v257
      %v290 = vunpack.c.l.b16 %v258
      %v291 = vunpack.c.l.b16 %v259
      %v292 = vunpack.c.l.b16 %v260
      %v293 = vunpack.c.l.b16 %v261
      %v294 = vunpack.c.l.b16 %v262
      %v295 = vpack.c.b16 %v280, %v279
      %v296 = vpack.c.b16 %v282, %v281
      %v297 = vpack.c.b16 %v284, %v283
      %v298 = vpack.c.b16 %v286, %v285
      %v299 = vpack.c.b16 %v288, %v287
      %v300 = vpack.c.b16 %v290, %v289
      %v301 = vpack.c.b16 %v292, %v291
      %v302 = vpack.c.b16 %v294, %v293
      %311 = vmatprep.subr.bf16.mxu0 0
      %312 = vmatpush1.bf16.msra.mxu0 %v295
      %313 = vmatprep.subr.bf16.mxu0 0
      %314 = vmatpush1.bf16.msra.mxu0 %v296
      %315 = vmatprep.subr.bf16.mxu0 0
      %316 = vmatpush1.bf16.msra.mxu0 %v297
      %317 = vmatprep.subr.bf16.mxu0 0
      %318 = vmatpush1.bf16.msra.mxu0 %v298
      %319 = vmatprep.subr.bf16.mxu0 0
      %320 = vmatpush1.bf16.msra.mxu0 %v299
      %321 = vmatprep.subr.bf16.mxu0 0
      %322 = vmatpush1.bf16.msra.mxu0 %v300
      %323 = vmatprep.subr.bf16.mxu0 0
      %324 = vmatpush1.bf16.msra.mxu0 %v301
      %325 = vmatprep.subr.bf16.mxu0 0
      %326 = vmatpush1.bf16.msra.mxu0 %v302
      %327 = vmatprep.subr.bf16.mxu0 0
      %328 = vmatpush1.bf16.msra.mxu0 0
      %329 = vmatprep.subr.bf16.mxu0 0
      %330 = vmatpush1.bf16.msra.mxu0 0
      %331 = vmatprep.subr.bf16.mxu0 0
      %332 = vmatpush1.bf16.msra.mxu0 0
      %333 = vmatprep.subr.bf16.mxu0 0
      %334 = vmatpush1.bf16.msra.mxu0 0
      %335 = vmatprep.subr.bf16.mxu0 0
      %336 = vmatpush1.bf16.msra.mxu0 0
      %337 = vmatprep.subr.bf16.mxu0 0
      %338 = vmatpush1.bf16.msra.mxu0 0
      %339 = vmatprep.subr.bf16.mxu0 0
      %340 = vmatpush1.bf16.msra.mxu0 0
      %341 = vmatprep.subr.bf16.mxu0 0
      %342 = vmatpush1.bf16.msra.mxu0 0
      %343 = vmatprep.mubr.bf16.mxu0 0
      %344 = vmatmul.mubr.bf16.gmra.mrb[0].mxu0 %v235
      %v345 = vpop.f32.mrb[0].mxu0
      %v346 = vadd.f32 0.0, %v345
      %v347 = vpop.f32.mrb[0].mxu0
      %v348 = vpop.f32.mrb[0].mxu0
      %v349 = vadd.f32 0.0, %v348
      %v350 = vpop.f32.mrb[0].mxu0
      %351 = vmatprep.mubr.bf16.mxu0 0
      %352 = vmatmul.mubr.bf16.gmra.mrb[0].mxu0 %v236
      %v353 = vpop.f32.mrb[0].mxu0
      %v354 = vadd.f32 0.0, %v353
      %v355 = vpop.f32.mrb[0].mxu0
      %v356 = vpop.f32.mrb[0].mxu0
      %v357 = vadd.f32 0.0, %v356
      %v358 = vpop.f32.mrb[0].mxu0
      %359 = vmatprep.mubr.bf16.mxu0 0
      %360 = vmatmul.mubr.bf16.gmra.mrb[0].mxu0 %v237
      %v361 = vpop.f32.mrb[0].mxu0
      %v362 = vadd.f32 0.0, %v361
      %v363 = vpop.f32.mrb[0].mxu0
      %v364 = vpop.f32.mrb[0].mxu0
      %v365 = vadd.f32 0.0, %v364
      %v366 = vpop.f32.mrb[0].mxu0
      %367 = vmatprep.mubr.bf16.mxu0 0
      %368 = vmatmul.mubr.bf16.gmra.mrb[0].mxu0 %v238
      %v369 = vpop.f32.mrb[0].mxu0
      %v370 = vadd.f32 0.0, %v369
      %v371 = vpop.f32.mrb[0].mxu0
      %v372 = vpop.f32.mrb[0].mxu0
      %v373 = vadd.f32 0.0, %v372
      %v374 = vpop.f32.mrb[0].mxu0
      %375 = vdwg.mxu0
      %v376 = vadd.f32 %v239, %v346
      %v377 = vadd.f32 %v240, %v349
      %v378 = vadd.f32 %v241, %v354
      %v379 = vadd.f32 %v242, %v357
      %v380 = vadd.f32 %v243, %v362
      %v381 = vadd.f32 %v244, %v365
      %v382 = vadd.f32 %v245, %v370
      %v383 = vadd.f32 %v246, %v373
      %vm384 = vcmask 130048
      %385 = vst.msk [vmem:[#allocation2] sm:$0xff] %vm384, %v376
      %386 = vst.msk [vmem:[#allocation2 + $0x8] sm:$0xff] %vm384, %v377
      %387 = vst.msk [vmem:[#allocation2 + $0x10] sm:$0xff] %vm384, %v378
      %388 = vst.msk [vmem:[#allocation2 + $0x18] sm:$0xff] %vm384, %v379
      %389 = vst.msk [vmem:[#allocation2 + $0x20] sm:$0xff] %vm384, %v380
      %390 = vst.msk [vmem:[#allocation2 + $0x28] sm:$0xff] %vm384, %v381
      %391 = vst.msk [vmem:[#allocation2 + $0x30] sm:$0xff] %vm384, %v382
      %392 = vst.msk [vmem:[#allocation2 + $0x38] sm:$0xff] %vm384, %v383
      // Predicated region
      $region37: #{gcn_clusternet_forward.8} parent=31 // pred_check
        %p393 = pneg %p220
      $region38: #{gcn_clusternet_forward.8} parent=31 // pred_check_branch
        %395 = sbr.rel (%p393) target = $region40
      $region39: #{gcn_clusternet_forward.8} parent=31 // pred_region
        %v396 = vld [vmem:[#allocation2] sm:$0xff]
        %v397 = vld [vmem:[#allocation2 + $0x8] sm:$0xff]
        %v398 = vld [vmem:[#allocation2 + $0x10] sm:$0xff]
        %v399 = vld [vmem:[#allocation2 + $0x18] sm:$0xff]
        %v400 = vld [vmem:[#allocation2 + $0x20] sm:$0xff]
        %v401 = vld [vmem:[#allocation2 + $0x28] sm:$0xff]
        %v402 = vld [vmem:[#allocation2 + $0x30] sm:$0xff]
        %v403 = vld [vmem:[#allocation2 + $0x38] sm:$0xff]
        %v404 = vld [vmem:[%s2] sm:$0x1]
        %v406 = vlaneseq
        %v407 = vshrl.u32 %v406, 7
        %v408 = vsub.s32 0, %v407
        %v409 = vrot.slane %v404, %v408
        %v411 = vadd.f32 %v396, %v409
        %v412 = vadd.f32 %v397, %v409
        %v413 = vadd.f32 %v398, %v409
        %v414 = vadd.f32 %v399, %v409
        %v415 = vadd.f32 %v400, %v409
        %v416 = vadd.f32 %v401, %v409
        %v417 = vadd.f32 %v402, %v409
        %v418 = vadd.f32 %v403, %v409
        %419 = vst.msk [vmem:[%s217] sm:$0xff] %vm384, %v411
        %420 = vst.msk [vmem:[%s217 + $0x8] sm:$0xff] %vm384, %v412
        %421 = vst.msk [vmem:[%s217 + $0x10] sm:$0xff] %vm384, %v413
        %422 = vst.msk [vmem:[%s217 + $0x18] sm:$0xff] %vm384, %v414
        %423 = vst.msk [vmem:[%s217 + $0x20] sm:$0xff] %vm384, %v415
        %424 = vst.msk [vmem:[%s217 + $0x28] sm:$0xff] %vm384, %v416
        %425 = vst.msk [vmem:[%s217 + $0x30] sm:$0xff] %vm384, %v417
        %426 = vst.msk [vmem:[%s217 + $0x38] sm:$0xff] %vm384, %v418
      $region40: #{gcn_clusternet_forward.8} parent=31 // pred_fallthru
        _
      %s427 = smul.u32 8, %s18
      %p428 = scmp.lt.s32.totalorder %s427, 15
      %s429 = scalar_select %p428, %s427, 15
      %s430 = smul.addr %s429, 8
      %s431 = scalar_lea.vmem %s3, %s430
      // Predicated region
      $region41: #{gcn_clusternet_forward.8} parent=31 // pred_check
        %p432 = pneg %p119
      $region42: #{gcn_clusternet_forward.8} parent=31 // pred_check_branch
        %434 = sbr.rel (%p432) target = $region44
      $region43: #{gcn_clusternet_forward.8} parent=31 // pred_region
        %s435 = smul.u32 8, %s18
      $region44: #{gcn_clusternet_forward.8} parent=31 // pred_fallthru
        _
    $region32: #{gcn_clusternet_forward.8} parent=5 // pred_fallthru
      _
    %p436 = scmp.le.s32.totalorder 2, %s9
    // Predicated region
    $region45: #{gcn_clusternet_forward.8} parent=5 // pred_check
      %p437 = pneg %p436
    $region46: #{gcn_clusternet_forward.8} parent=5 // pred_check_branch
      %439 = sbr.rel (%p437) target = $region48
    $region47: #{gcn_clusternet_forward.8} parent=5 // pred_region
      %s440 = ssub.s32 %s9, 2
      // Predicated region
      $region49: #{gcn_clusternet_forward.8} parent=47 // pred_check
        %p441 = pneg %p125
      $region50: #{gcn_clusternet_forward.8} parent=47 // pred_check_branch
        %443 = sbr.rel (%p441) target = $region52
      $region51: #{gcn_clusternet_forward.8} parent=47 // pred_region
        %s444 = smul.u32 8, %s20
        %p445 = scmp.lt.s32.totalorder %s444, 15
        %s446 = scalar_select %p445, %s444, 15
        %s447 = smul.addr %s446, 8
        %s448 = scalar_lea.vmem %s3, %s447
      $region52: #{gcn_clusternet_forward.8} parent=47 // pred_fallthru
        _
    $region48: #{gcn_clusternet_forward.8} parent=5 // pred_fallthru
      _
  $region6: #{gcn_clusternet_forward.8} parent=0 // loop_footer
    %s13 = sadd.s32 1, %s9
  $region7: #{gcn_clusternet_forward.8} parent=0 // loop_footer_branch
    %8 = sbr.rel target = $region3
  $region8: #{gcn_clusternet_forward.8} parent=0 // loop_exit
    _

// kernel: gcn_clusternet_forward.6
$region0: #{gcn_clusternet_forward.6}
  #allocation0 [shape = 'u32[]', space=smem, size = 0x4, offset = 0x4, fixed_abs, tag = 'smem constant byte address 0x4 - core index']
  #allocation1 [shape = 'u32[144,128]{1,0:T(1,128)}', space=vmem, size = 0x12000, scoped, tag = 'internal scratch']
  %s0 = inlined_call_operand.vmem [shape: bf16[128,32], index: 0, kind: input, shape index: {}]
  %s1 = inlined_call_operand.vmem [shape: bf16[32,32], index: 1, kind: input, shape index: {}]
  %s2 = inlined_call_operand.vmem [shape: bf16[128,32], index: 2, kind: output, shape index: {}]
  %s3 = sld [smem:[#allocation0]]
  $region41: #{gcn_clusternet_forward.6} parent=0
    _
  %s5 = ssub.s32 1, %s3
  %s6 = scalar_select 0, %s5, %s3
  loop: start=0, step=1, limit=4
  $region2: #{gcn_clusternet_forward.6} parent=0 // loop_pre_header
    _
  $region3: #{gcn_clusternet_forward.6} parent=0 // loop_header
    %s8 = sphi 0, %s12
    %p9 = scmp.ge.s32.totalorder %s8, 4
    %s18 = sphi 0, %s20
    %s21 = sphi 0, %s18
    %s22 = sphi 0, %s21
    %s38 = sphi 0, %s22
    %s42 = sphi 0, %s42
    %s44 = sphi 0, %s42
    %s45 = sphi 0, %s44
    %s59 = sphi 0, %s45
    %s65 = sphi 0, %s67
    %s68 = sphi 0, %s65
    %s69 = sphi 0, %s68
    %s85 = sphi 0, %s69
  $region4: #{gcn_clusternet_forward.6} parent=0 // loop_header_branch
    %11 = sbr.rel (%p9) target = $region8
  $region5: #{gcn_clusternet_forward.6} parent=0 // loop_body
    %s13 = ssub.s32 %s8, 1
    %s14 = ssub.s32 %s8, 2
    %s15 = sadd.s32 %s8, 1
    %s16 = ssub.s32 %s8, %s15
    %p17 = scmp.eq.s32.totalorder %s16, 0
    %s19 = sadd.s32 %s18, 1
    %s20 = scalar_select %p17, %s18, %s19
    %p23 = pneg %p17
    %p24 = scmp.eq.s32.totalorder %s8, 1
    %p25 = por %p23, %p24
    %p26 = scmp.ne.s32.totalorder %s18, %s21
    %p27 = scmp.eq.s32.totalorder %s8, 0
    %p28 = por %p26, %p27
    %p29 = scmp.ne.s32.totalorder %s18, %s21
    %p30 = scmp.eq.s32.totalorder %s13, 1
    %p31 = por %p29, %p30
    %p32 = scmp.ne.s32.totalorder %s21, %s22
    %p33 = scmp.eq.s32.totalorder %s13, 0
    %p34 = por %p32, %p33
    %p35 = scmp.ne.s32.totalorder %s21, %s22
    %p36 = scmp.eq.s32.totalorder %s14, 1
    %p37 = por %p35, %p36
    %p39 = scmp.ne.s32.totalorder %s22, %s38
    %p40 = scmp.eq.s32.totalorder %s14, 0
    %p41 = por %p39, %p40
    %s43 = sadd.s32 %s42, 1
    %p46 = scmp.eq.s32.totalorder %s8, 1
    %p47 = scmp.ne.s32.totalorder %s42, %s44
    %p48 = scmp.eq.s32.totalorder %s8, 0
    %p49 = por %p47, %p48
    %p50 = scmp.ne.s32.totalorder %s42, %s44
    %p51 = scmp.eq.s32.totalorder %s13, 1
    %p52 = por %p50, %p51
    %p53 = scmp.ne.s32.totalorder %s44, %s45
    %p54 = scmp.eq.s32.totalorder %s13, 0
    %p55 = por %p53, %p54
    %p56 = scmp.ne.s32.totalorder %s44, %s45
    %p57 = scmp.eq.s32.totalorder %s14, 1
    %p58 = por %p56, %p57
    %p60 = scmp.ne.s32.totalorder %s45, %s59
    %p61 = scmp.eq.s32.totalorder %s14, 0
    %p62 = por %p60, %p61
    %s63 = ssub.s32 %s8, %s15
    %p64 = scmp.eq.s32.totalorder %s63, 0
    %s66 = sadd.s32 %s65, 1
    %s67 = scalar_select %p64, %s65, %s66
    %p70 = pneg %p64
    %p71 = scmp.eq.s32.totalorder %s8, 1
    %p72 = por %p70, %p71
    %p73 = scmp.ne.s32.totalorder %s65, %s68
    %p74 = scmp.eq.s32.totalorder %s8, 0
    %p75 = por %p73, %p74
    %p76 = scmp.ne.s32.totalorder %s65, %s68
    %p77 = scmp.eq.s32.totalorder %s13, 1
    %p78 = por %p76, %p77
    %p79 = scmp.ne.s32.totalorder %s68, %s69
    %p80 = scmp.eq.s32.totalorder %s13, 0
    %p81 = por %p79, %p80
    %p82 = scmp.ne.s32.totalorder %s68, %s69
    %p83 = scmp.eq.s32.totalorder %s14, 1
    %p84 = por %p82, %p83
    %p86 = scmp.ne.s32.totalorder %s69, %s85
    %p87 = scmp.eq.s32.totalorder %s14, 0
    %p88 = por %p86, %p87
    %p89 = scmp.le.s32.totalorder 1, %s8
    %p90 = scmp.lt.s32.totalorder %s8, 3
    %p91 = pnand %p89, %p90
    %p92 = pneg %p91
    // Predicated region
    $region9: #{gcn_clusternet_forward.6} parent=5 // pred_check
      _
    $region10: #{gcn_clusternet_forward.6} parent=5 // pred_check_branch
      %94 = sbr.rel (%p91) target = $region12
    $region11: #{gcn_clusternet_forward.6} parent=5 // pred_region
      %s95 = ssub.s32 %s8, 1
      // Predicated region
      $region13: #{gcn_clusternet_forward.6} parent=11 // pred_check
        %p96 = pneg %p55
      $region14: #{gcn_clusternet_forward.6} parent=11 // pred_check_branch
        %98 = sbr.rel (%p96) target = $region16
      $region15: #{gcn_clusternet_forward.6} parent=11 // pred_region
        _
      $region16: #{gcn_clusternet_forward.6} parent=11 // pred_fallthru
        _
    $region12: #{gcn_clusternet_forward.6} parent=5 // pred_fallthru
      _
    %p99 = scmp.lt.s32.totalorder %s8, 2
    // Predicated region
    $region17: #{gcn_clusternet_forward.6} parent=5 // pred_check
      %p100 = pneg %p99
    $region18: #{gcn_clusternet_forward.6} parent=5 // pred_check_branch
      %102 = sbr.rel (%p100) target = $region20
    $region19: #{gcn_clusternet_forward.6} parent=5 // pred_region
      // Predicated region
      $region21: #{gcn_clusternet_forward.6} parent=19 // pred_check
        %p103 = pneg %p28
      $region22: #{gcn_clusternet_forward.6} parent=19 // pred_check_branch
        %105 = sbr.rel (%p103) target = $region24
      $region23: #{gcn_clusternet_forward.6} parent=19 // pred_region
        %s106 = smul.u32 8, %s8
        %p107 = scmp.lt.s32.totalorder %s106, 15
        %s108 = scalar_select %p107, %s106, 15
        %s109 = smul.addr %s108, 4
        %s110 = scalar_lea.vmem %s0, %s109
        %s111 = smul.u32 8, %s8
      $region24: #{gcn_clusternet_forward.6} parent=19 // pred_fallthru
        _
    $region20: #{gcn_clusternet_forward.6} parent=5 // pred_fallthru
      _
    %p112 = scmp.le.s32.totalorder 1, %s8
    %p113 = scmp.lt.s32.totalorder %s8, 3
    %p114 = pnand %p112, %p113
    %p115 = pneg %p114
    // Predicated region
    $region25: #{gcn_clusternet_forward.6} parent=5 // pred_check
      _
    $region26: #{gcn_clusternet_forward.6} parent=5 // pred_check_branch
      %117 = sbr.rel (%p114) target = $region28
    $region27: #{gcn_clusternet_forward.6} parent=5 // pred_region
      %s118 = ssub.s32 %s8, 1
      %s119 = smul.u32 8, %s13
      %p120 = scmp.lt.s32.totalorder %s119, 15
      %s121 = scalar_select %p120, %s119, 15
      %s122 = smul.addr %s121, 4
      %s123 = scalar_lea.vmem %s0, %s122
      %p124 = pneg %p34
      %p125 = pneg %p31
      %p126 = pneg %p55
      %p127 = pneg %p52
      %p128 = pneg %p81
      %p129 = pneg %p78
      %s130 = smul.u32 8, %s13
      %p131 = scmp.lt.s32.totalorder %s130, 15
      %s132 = scalar_select %p131, %s130, 15
      %s133 = smul.addr %s132, 4
      %s134 = scalar_lea.vmem %s2, %s133
      %s135 = smul.u32 8, %s13
      %p136 = scmp.lt.s32.totalorder %s135, 15
      %s137 = scalar_select %p136, %s135, 15
      %s138 = smul.addr %s137, 4
      %s139 = scalar_lea.vmem %s0, %s138
      %s140 = smul.u32 8, %s13
      %s141 = smul.u32 8, %s13
      %p142 = scmp.lt.s32.totalorder %s141, 15
      %s143 = scalar_select %p142, %s141, 15
      %s144 = smul.addr %s143, 4
      %s145 = scalar_lea.vmem %s2, %s144
      %s146 = smul.u32 8, %s13
      %v148 = vld [vmem:[%s139] sm:$0xf]
      %v149 = vld [vmem:[%s139 + $0x4] sm:$0xf]
      %v150 = vld [vmem:[%s139 + $0x8] sm:$0xf]
      %v151 = vld [vmem:[%s139 + $0xc] sm:$0xf]
      %v152 = vld [vmem:[%s139 + $0x10] sm:$0xf]
      %v153 = vld [vmem:[%s139 + $0x14] sm:$0xf]
      %v154 = vld [vmem:[%s139 + $0x18] sm:$0xf]
      %v155 = vld [vmem:[%s139 + $0x1c] sm:$0xf]
      %v156 = vld [vmem:[%s1] sm:$0xf]
      %v157 = vld [vmem:[%s1 + $0x4] sm:$0xf]
      %v158 = vld [vmem:[%s1 + $0x8] sm:$0xf]
      %v159 = vld [vmem:[%s1 + $0xc] sm:$0xf]
      %v168 = vunpack.c.l.b16 %v148
      %v169 = vunpack.c.l.b16 %v149
      %v170 = vunpack.c.l.b16 %v150
      %v171 = vunpack.c.l.b16 %v151
      %v172 = vunpack.c.l.b16 %v152
      %v173 = vunpack.c.l.b16 %v153
      %v174 = vunpack.c.l.b16 %v154
      %v175 = vunpack.c.l.b16 %v155
      %v176 = vpack.c.b16 %v169, %v168
      %v177 = vpack.c.b16 %v171, %v170
      %v178 = vpack.c.b16 %v173, %v172
      %v179 = vpack.c.b16 %v175, %v174
      %v184 = vunpack.c.l.b16 %v156
      %v185 = vunpack.c.l.b16 %v157
      %v186 = vunpack.c.l.b16 %v158
      %v187 = vunpack.c.l.b16 %v159
      %v188 = vpack.c.b16 %v185, %v184
      %v189 = vpack.c.b16 %v187, %v186
      %vm192 = vcmask 261120
      %v194 = vsel %vm192, %v176, 0
      %v197 = vsel %vm192, %v177, 0
      %v200 = vsel %vm192, %v178, 0
      %v203 = vsel %vm192, %v179, 0
      %205 = vmatprep.subr.bf16.mxu0 0
      %206 = vmatpush1.bf16.msra.mxu0 %v188
      %207 = vmatprep.subr.bf16.mxu0 0
      %208 = vmatpush1.bf16.msra.mxu0 %v189
      %209 = vmatprep.subr.bf16.mxu0 0
      %210 = vmatpush1.bf16.msra.mxu0 0
      %211 = vmatprep.subr.bf16.mxu0 0
      %212 = vmatpush1.bf16.msra.mxu0 0
      %213 = vmatprep.subr.bf16.mxu0 0
      %214 = vmatpush1.bf16.msra.mxu0 0
      %215 = vmatprep.subr.bf16.mxu0 0
      %216 = vmatpush1.bf16.msra.mxu0 0
      %217 = vmatprep.subr.bf16.mxu0 0
      %218 = vmatpush1.bf16.msra.mxu0 0
      %219 = vmatprep.subr.bf16.mxu0 0
      %220 = vmatpush1.bf16.msra.mxu0 0
      %221 = vmatprep.subr.bf16.mxu0 0
      %222 = vmatpush1.bf16.msra.mxu0 0
      %223 = vmatprep.subr.bf16.mxu0 0
      %224 = vmatpush1.bf16.msra.mxu0 0
      %225 = vmatprep.subr.bf16.mxu0 0
      %226 = vmatpush1.bf16.msra.mxu0 0
      %227 = vmatprep.subr.bf16.mxu0 0
      %228 = vmatpush1.bf16.msra.mxu0 0
      %229 = vmatprep.subr.bf16.mxu0 0
      %230 = vmatpush1.bf16.msra.mxu0 0
      %231 = vmatprep.subr.bf16.mxu0 0
      %232 = vmatpush1.bf16.msra.mxu0 0
      %233 = vmatprep.subr.bf16.mxu0 0
      %234 = vmatpush1.bf16.msra.mxu0 0
      %235 = vmatprep.subr.bf16.mxu0 0
      %236 = vmatpush1.bf16.msra.mxu0 0
      %237 = vmatprep.mubr.bf16.mxu0 0
      %238 = vmatmul.mubr.bf16.gmra.mrb[0].mxu0 %v194
      %v239 = vpop.f32.mrb[0].mxu0
      %v240 = vadd.f32 0.0, %v239
      %v241 = vpop.f32.mrb[0].mxu0
      %v242 = vpop.f32.mrb[0].mxu0
      %v243 = vadd.f32 0.0, %v242
      %v244 = vpop.f32.mrb[0].mxu0
      %245 = vmatprep.mubr.bf16.mxu0 0
      %246 = vmatmul.mubr.bf16.gmra.mrb[0].mxu0 %v197
      %v247 = vpop.f32.mrb[0].mxu0
      %v248 = vadd.f32 0.0, %v247
      %v249 = vpop.f32.mrb[0].mxu0
      %v250 = vpop.f32.mrb[0].mxu0
      %v251 = vadd.f32 0.0, %v250
      %v252 = vpop.f32.mrb[0].mxu0
      %253 = vmatprep.mubr.bf16.mxu0 0
      %254 = vmatmul.mubr.bf16.gmra.mrb[0].mxu0 %v200
      %v255 = vpop.f32.mrb[0].mxu0
      %v256 = vadd.f32 0.0, %v255
      %v257 = vpop.f32.mrb[0].mxu0
      %v258 = vpop.f32.mrb[0].mxu0
      %v259 = vadd.f32 0.0, %v258
      %v260 = vpop.f32.mrb[0].mxu0
      %261 = vmatprep.mubr.bf16.mxu0 0
      %262 = vmatmul.mubr.bf16.gmra.mrb[0].mxu0 %v203
      %v263 = vpop.f32.mrb[0].mxu0
      %v264 = vadd.f32 0.0, %v263
      %v265 = vpop.f32.mrb[0].mxu0
      %v266 = vpop.f32.mrb[0].mxu0
      %v267 = vadd.f32 0.0, %v266
      %v268 = vpop.f32.mrb[0].mxu0
      %269 = vdwg.mxu0
      %v270 = vpack.c.bf16 %v243, %v240
      %v271 = vpack.c.bf16 %v251, %v248
      %v272 = vpack.c.bf16 %v259, %v256
      %v273 = vpack.c.bf16 %v267, %v264
      %v278 = vunpack.c.l.b16 %v270
      %v279 = vunpack.c.h.b16 %v270
      %v280 = vunpack.c.l.b16 %v271
      %v281 = vunpack.c.h.b16 %v271
      %v282 = vunpack.c.l.b16 %v272
      %v283 = vunpack.c.h.b16 %v272
      %v284 = vunpack.c.l.b16 %v273
      %v285 = vunpack.c.h.b16 %v273
      %v286 = vpack.c.b16 %v278, %v278
      %v287 = vpack.c.b16 %v279, %v279
      %v288 = vpack.c.b16 %v280, %v280
      %v289 = vpack.c.b16 %v281, %v281
      %v290 = vpack.c.b16 %v282, %v282
      %v291 = vpack.c.b16 %v283, %v283
      %v292 = vpack.c.b16 %v284, %v284
      %v293 = vpack.c.b16 %v285, %v285
      %vm302 = vcmask 257024
      %303 = vst.msk [vmem:[%s145] sm:$0xf] %vm302, %v286
      %304 = vst.msk [vmem:[%s145 + $0x4] sm:$0xf] %vm302, %v287
      %305 = vst.msk [vmem:[%s145 + $0x8] sm:$0xf] %vm302, %v288
      %306 = vst.msk [vmem:[%s145 + $0xc] sm:$0xf] %vm302, %v289
      %307 = vst.msk [vmem:[%s145 + $0x10] sm:$0xf] %vm302, %v290
      %308 = vst.msk [vmem:[%s145 + $0x14] sm:$0xf] %vm302, %v291
      %309 = vst.msk [vmem:[%s145 + $0x18] sm:$0xf] %vm302, %v292
      %310 = vst.msk [vmem:[%s145 + $0x1c] sm:$0xf] %vm302, %v293
      %s311 = smul.u32 8, %s13
      %p312 = scmp.lt.s32.totalorder %s311, 15
      %s313 = scalar_select %p312, %s311, 15
      %s314 = smul.addr %s313, 4
      %s315 = scalar_lea.vmem %s2, %s314
      // Predicated region
      $region29: #{gcn_clusternet_forward.6} parent=27 // pred_check
        %p316 = pneg %p78
      $region30: #{gcn_clusternet_forward.6} parent=27 // pred_check_branch
        %318 = sbr.rel (%p316) target = $region32
      $region31: #{gcn_clusternet_forward.6} parent=27 // pred_region
        %s319 = smul.u32 8, %s13
      $region32: #{gcn_clusternet_forward.6} parent=27 // pred_fallthru
        _
    $region28: #{gcn_clusternet_forward.6} parent=5 // pred_fallthru
      _
    %p320 = scmp.le.s32.totalorder 2, %s8
    // Predicated region
    $region33: #{gcn_clusternet_forward.6} parent=5 // pred_check
      %p321 = pneg %p320
    $region34: #{gcn_clusternet_forward.6} parent=5 // pred_check_branch
      %323 = sbr.rel (%p321) target = $region36
    $region35: #{gcn_clusternet_forward.6} parent=5 // pred_region
      %s324 = ssub.s32 %s8, 2
      // Predicated region
      $region37: #{gcn_clusternet_forward.6} parent=35 // pred_check
        %p325 = pneg %p84
      $region38: #{gcn_clusternet_forward.6} parent=35 // pred_check_branch
        %327 = sbr.rel (%p325) target = $region40
      $region39: #{gcn_clusternet_forward.6} parent=35 // pred_region
        %s328 = smul.u32 8, %s14
        %p329 = scmp.lt.s32.totalorder %s328, 15
        %s330 = scalar_select %p329, %s328, 15
        %s331 = smul.addr %s330, 4
        %s332 = scalar_lea.vmem %s2, %s331
      $region40: #{gcn_clusternet_forward.6} parent=35 // pred_fallthru
        _
    $region36: #{gcn_clusternet_forward.6} parent=5 // pred_fallthru
      _
  $region6: #{gcn_clusternet_forward.6} parent=0 // loop_footer
    %s12 = sadd.s32 1, %s8
  $region7: #{gcn_clusternet_forward.6} parent=0 // loop_footer_branch
    %7 = sbr.rel target = $region3
  $region8: #{gcn_clusternet_forward.6} parent=0 // loop_exit
    _

// kernel: gcn_clusternet_forward.7
$region0: #{gcn_clusternet_forward.7}
  #allocation0 [shape = 'u32[]', space=smem, size = 0x4, offset = 0x4, fixed_abs, tag = 'smem constant byte address 0x4 - core index']
  #allocation1 [shape = 'u32[144,128]{1,0:T(1,128)}', space=vmem, size = 0x12000, scoped, tag = 'internal scratch']
  #allocation2 [shape = 'f32[64,32]{1,0:T(8,128)}', space=vmem, size = 0x8000, scoped, tag = 'scratch operand']
  %s0 = inlined_call_operand.vmem [shape: s8[128,128], index: 0, kind: input, shape index: {}]
  %s1 = inlined_call_operand.vmem [shape: bf16[128,32], index: 1, kind: input, shape index: {}]
  %s2 = inlined_call_operand.vmem [shape: f32[1,32], index: 2, kind: input, shape index: {}]
  %s3 = inlined_call_operand.vmem [shape: bf16[32,16], index: 3, kind: input, shape index: {}]
  %s4 = inlined_call_operand.vmem [shape: bf16[128,16], index: 4, kind: output, shape index: {}]
  %s5 = sld [smem:[#allocation0]]
  $region57: #{gcn_clusternet_forward.7} parent=0
    _
  %s7 = ssub.s32 1, %s5
  %s8 = scalar_select 0, %s7, %s5
  loop: start=0, step=1, limit=4
  $region2: #{gcn_clusternet_forward.7} parent=0 // loop_pre_header
    _
  $region3: #{gcn_clusternet_forward.7} parent=0 // loop_header
    %s10 = sphi 0, %s14
    %p11 = scmp.ge.s32.totalorder %s10, 4
    %s17 = sphi 0, %s29
    %s18 = sphi 0, %s25
    %s19 = sphi 0, %s17
    %s20 = sphi 0, %s18
    %s21 = sphi 0, %s19
    %s22 = sphi 0, %s20
    %s34 = sphi 0, %s36
    %s37 = sphi 0, %s34
    %s38 = sphi 0, %s37
    %s54 = sphi 0, %s38
    %s60 = sphi 0, %s62
    %s63 = sphi 0, %s60
    %s64 = sphi 0, %s63
    %s80 = sphi 0, %s64
    %s84 = sphi 0, %s84
    %s86 = sphi 0, %s84
    %s87 = sphi 0, %s86
    %s101 = sphi 0, %s87
    %s105 = sphi 0, %s105
    %s107 = sphi 0, %s105
    %s108 = sphi 0, %s107
    %s122 = sphi 0, %s108
    %s128 = sphi 0, %s130
    %s131 = sphi 0, %s128
    %s132 = sphi 0, %s131
    %s148 = sphi 0, %s132
  $region4: #{gcn_clusternet_forward.7} parent=0 // loop_header_branch
    %13 = sbr.rel (%p11) target = $region8
  $region5: #{gcn_clusternet_forward.7} parent=0 // loop_body
    %s15 = ssub.s32 %s10, 1
    %s16 = ssub.s32 %s10, 2
    %s23 = sadd.s32 1, %s18
    %p24 = scmp.ge.s32.totalorder %s23, 1
    %s25 = scalar_select %p24, 0, %s23
    %s26 = sadd.s32 1, %s17
    %s27 = scalar_select %p24, %s26, %s17
    %p28 = scmp.ge.s32.totalorder %s27, 2
    %s29 = scalar_select %p28, 0, %s27
    %s30 = ssub.s32 %s17, %s29
    %s31 = ssub.s32 %s18, %s25
    %s32 = sor.u32 %s30, %s31
    %p33 = scmp.eq.s32.totalorder %s32, 0
    %s35 = sadd.s32 %s34, 1
    %s36 = scalar_select %p33, %s34, %s35
    %p39 = pneg %p33
    %p40 = scmp.eq.s32.totalorder %s10, 1
    %p41 = por %p39, %p40
    %p42 = scmp.ne.s32.totalorder %s34, %s37
    %p43 = scmp.eq.s32.totalorder %s10, 0
    %p44 = por %p42, %p43
    %p45 = scmp.ne.s32.totalorder %s34, %s37
    %p46 = scmp.eq.s32.totalorder %s15, 1
    %p47 = por %p45, %p46
    %p48 = scmp.ne.s32.totalorder %s37, %s38
    %p49 = scmp.eq.s32.totalorder %s15, 0
    %p50 = por %p48, %p49
    %p51 = scmp.ne.s32.totalorder %s37, %s38
    %p52 = scmp.eq.s32.totalorder %s16, 1
    %p53 = por %p51, %p52
    %p55 = scmp.ne.s32.totalorder %s38, %s54
    %p56 = scmp.eq.s32.totalorder %s16, 0
    %p57 = por %p55, %p56
    %s58 = ssub.s32 %s18, %s25
    %p59 = scmp.eq.s32.totalorder %s58, 0
    %s61 = sadd.s32 %s60, 1
    %s62 = scalar_select %p59, %s60, %s61
    %p65 = pneg %p59
    %p66 = scmp.eq.s32.totalorder %s10, 1
    %p67 = por %p65, %p66
    %p68 = scmp.ne.s32.totalorder %s60, %s63
    %p69 = scmp.eq.s32.totalorder %s10, 0
    %p70 = por %p68, %p69
    %p71 = scmp.ne.s32.totalorder %s60, %s63
    %p72 = scmp.eq.s32.totalorder %s15, 1
    %p73 = por %p71, %p72
    %p74 = scmp.ne.s32.totalorder %s63, %s64
    %p75 = scmp.eq.s32.totalorder %s15, 0
    %p76 = por %p74, %p75
    %p77 = scmp.ne.s32.totalorder %s63, %s64
    %p78 = scmp.eq.s32.totalorder %s16, 1
    %p79 = por %p77, %p78
    %p81 = scmp.ne.s32.totalorder %s64, %s80
    %p82 = scmp.eq.s32.totalorder %s16, 0
    %p83 = por %p81, %p82
    %s85 = sadd.s32 %s84, 1
    %p88 = scmp.eq.s32.totalorder %s10, 1
    %p89 = scmp.ne.s32.totalorder %s84, %s86
    %p90 = scmp.eq.s32.totalorder %s10, 0
    %p91 = por %p89, %p90
    %p92 = scmp.ne.s32.totalorder %s84, %s86
    %p93 = scmp.eq.s32.totalorder %s15, 1
    %p94 = por %p92, %p93
    %p95 = scmp.ne.s32.totalorder %s86, %s87
    %p96 = scmp.eq.s32.totalorder %s15, 0
    %p97 = por %p95, %p96
    %p98 = scmp.ne.s32.totalorder %s86, %s87
    %p99 = scmp.eq.s32.totalorder %s16, 1
    %p100 = por %p98, %p99
    %p102 = scmp.ne.s32.totalorder %s87, %s101
    %p103 = scmp.eq.s32.totalorder %s16, 0
    %p104 = por %p102, %p103
    %s106 = sadd.s32 %s105, 1
    %p109 = scmp.eq.s32.totalorder %s10, 1
    %p110 = scmp.ne.s32.totalorder %s105, %s107
    %p111 = scmp.eq.s32.totalorder %s10, 0
    %p112 = por %p110, %p111
    %p113 = scmp.ne.s32.totalorder %s105, %s107
    %p114 = scmp.eq.s32.totalorder %s15, 1
    %p115 = por %p113, %p114
    %p116 = scmp.ne.s32.totalorder %s107, %s108
    %p117 = scmp.eq.s32.totalorder %s15, 0
    %p118 = por %p116, %p117
    %p119 = scmp.ne.s32.totalorder %s107, %s108
    %p120 = scmp.eq.s32.totalorder %s16, 1
    %p121 = por %p119, %p120
    %p123 = scmp.ne.s32.totalorder %s108, %s122
    %p124 = scmp.eq.s32.totalorder %s16, 0
    %p125 = por %p123, %p124
    %s126 = ssub.s32 %s17, %s29
    %p127 = scmp.eq.s32.totalorder %s126, 0
    %s129 = sadd.s32 %s128, 1
    %s130 = scalar_select %p127, %s128, %s129
    %p133 = pneg %p127
    %p134 = scmp.eq.s32.totalorder %s10, 1
    %p135 = por %p133, %p134
    %p136 = scmp.ne.s32.totalorder %s128, %s131
    %p137 = scmp.eq.s32.totalorder %s10, 0
    %p138 = por %p136, %p137
    %p139 = scmp.ne.s32.totalorder %s128, %s131
    %p140 = scmp.eq.s32.totalorder %s15, 1
    %p141 = por %p139, %p140
    %p142 = scmp.ne.s32.totalorder %s131, %s132
    %p143 = scmp.eq.s32.totalorder %s15, 0
    %p144 = por %p142, %p143
    %p145 = scmp.ne.s32.totalorder %s131, %s132
    %p146 = scmp.eq.s32.totalorder %s16, 1
    %p147 = por %p145, %p146
    %p149 = scmp.ne.s32.totalorder %s132, %s148
    %p150 = scmp.eq.s32.totalorder %s16, 0
    %p151 = por %p149, %p150
    %p152 = scmp.le.s32.totalorder 1, %s10
    %p153 = scmp.lt.s32.totalorder %s10, 3
    %p154 = pnand %p152, %p153
    %p155 = pneg %p154
    // Predicated region
    $region9: #{gcn_clusternet_forward.7} parent=5 // pred_check
      _
    $region10: #{gcn_clusternet_forward.7} parent=5 // pred_check_branch
      %157 = sbr.rel (%p154) target = $region12
    $region11: #{gcn_clusternet_forward.7} parent=5 // pred_region
      %s158 = ssub.s32 %s10, 1
      // Predicated region
      $region13: #{gcn_clusternet_forward.7} parent=11 // pred_check
        %p159 = pneg %p76
      $region14: #{gcn_clusternet_forward.7} parent=11 // pred_check_branch
        %161 = sbr.rel (%p159) target = $region16
      $region15: #{gcn_clusternet_forward.7} parent=11 // pred_region
        %s162 = smul.u32 16, %s20
        %p163 = scmp.lt.s32.totalorder %s162, 15
        %s164 = scalar_select %p163, %s162, 15
        %s165 = smul.addr %s164, 4
        %s166 = scalar_lea.vmem %s1, %s165
        %s167 = smul.u32 16, %s20
      $region16: #{gcn_clusternet_forward.7} parent=11 // pred_fallthru
        _
      // Predicated region
      $region17: #{gcn_clusternet_forward.7} parent=11 // pred_check
        %p168 = pneg %p97
      $region18: #{gcn_clusternet_forward.7} parent=11 // pred_check_branch
        %170 = sbr.rel (%p168) target = $region20
      $region19: #{gcn_clusternet_forward.7} parent=11 // pred_region
        _
      $region20: #{gcn_clusternet_forward.7} parent=11 // pred_fallthru
        _
      // Predicated region
      $region21: #{gcn_clusternet_forward.7} parent=11 // pred_check
        %p171 = pneg %p118
      $region22: #{gcn_clusternet_forward.7} parent=11 // pred_check_branch
        %173 = sbr.rel (%p171) target = $region24
      $region23: #{gcn_clusternet_forward.7} parent=11 // pred_region
        _
      $region24: #{gcn_clusternet_forward.7} parent=11 // pred_fallthru
        _
    $region12: #{gcn_clusternet_forward.7} parent=5 // pred_fallthru
      _
    %p174 = scmp.lt.s32.totalorder %s10, 2
    // Predicated region
    $region25: #{gcn_clusternet_forward.7} parent=5 // pred_check
      %p175 = pneg %p174
    $region26: #{gcn_clusternet_forward.7} parent=5 // pred_check_branch
      %177 = sbr.rel (%p175) target = $region28
    $region27: #{gcn_clusternet_forward.7} parent=5 // pred_region
      // Predicated region
      $region29: #{gcn_clusternet_forward.7} parent=27 // pred_check
        %p178 = pneg %p44
      $region30: #{gcn_clusternet_forward.7} parent=27 // pred_check_branch
        %180 = sbr.rel (%p178) target = $region32
      $region31: #{gcn_clusternet_forward.7} parent=27 // pred_region
        %s181 = smul.u32 2, %s17
        %p182 = scmp.lt.s32.totalorder %s181, 3
        %s183 = scalar_select %p182, %s181, 3
        %p184 = scmp.lt.s32.totalorder %s18, 0
        %s185 = scalar_select %p184, %s18, 0
        %s186 = sadd.s32 %s185, %s183
        %s187 = smul.addr %s186, 8
        %s188 = scalar_lea.vmem %s0, %s187
        %s189 = smul.u32 2, %s17
      $region32: #{gcn_clusternet_forward.7} parent=27 // pred_fallthru
        _
    $region28: #{gcn_clusternet_forward.7} parent=5 // pred_fallthru
      _
    %p190 = scmp.le.s32.totalorder 1, %s10
    %p191 = scmp.lt.s32.totalorder %s10, 3
    %p192 = pnand %p190, %p191
    %p193 = pneg %p192
    // Predicated region
    $region33: #{gcn_clusternet_forward.7} parent=5 // pred_check
      _
    $region34: #{gcn_clusternet_forward.7} parent=5 // pred_check_branch
      %195 = sbr.rel (%p192) target = $region36
    $region35: #{gcn_clusternet_forward.7} parent=5 // pred_region
      %s196 = ssub.s32 %s10, 1
      %s197 = smul.u32 2, %s19
      %p198 = scmp.lt.s32.totalorder %s197, 3
      %s199 = scalar_select %p198, %s197, 3
      %p200 = scmp.lt.s32.totalorder %s20, 0
      %s201 = scalar_select %p200, %s20, 0
      %s202 = sadd.s32 %s201, %s199
      %s203 = smul.addr %s202, 8
      %s204 = scalar_lea.vmem %s0, %s203
      %p205 = pneg %p50
      %p206 = pneg %p47
      %s207 = smul.u32 16, %s20
      %p208 = scmp.lt.s32.totalorder %s207, 15
      %s209 = scalar_select %p208, %s207, 15
      %s210 = smul.addr %s209, 4
      %s211 = scalar_lea.vmem %s1, %s210
      %p212 = pneg %p76
      %p213 = pneg %p73
      %p214 = pneg %p97
      %p215 = pneg %p94
      %p216 = pneg %p118
      %p217 = pneg %p115
      %p218 = pneg %p144
      %p219 = pneg %p141
      %s220 = smul.u32 8, %s19
      %p221 = scmp.lt.s32.totalorder %s220, 15
      %s222 = scalar_select %p221, %s220, 15
      %s223 = smul.addr %s222, 4
      %s224 = scalar_lea.vmem %s4, %s223
      %s225 = smul.u32 2, %s19
      %p226 = scmp.lt.s32.totalorder %s225, 3
      %s227 = scalar_select %p226, %s225, 3
      %p228 = scmp.lt.s32.totalorder %s20, 0
      %s229 = scalar_select %p228, %s20, 0
      %s230 = sadd.s32 %s229, %s227
      %s231 = smul.addr %s230, 8
      %s232 = scalar_lea.vmem %s0, %s231
      %s233 = smul.u32 2, %s19
      %s234 = smul.u32 16, %s20
      %p235 = scmp.lt.s32.totalorder %s234, 15
      %s236 = scalar_select %p235, %s234, 15
      %s237 = smul.addr %s236, 4
      %s238 = scalar_lea.vmem %s1, %s237
      %s239 = smul.u32 16, %s20
      %s240 = smul.u32 8, %s19
      %p241 = scmp.lt.s32.totalorder %s240, 15
      %s242 = scalar_select %p241, %s240, 15
      %s243 = smul.addr %s242, 4
      %s244 = scalar_lea.vmem %s4, %s243
      %s245 = smul.u32 8, %s19
      %p247 = scmp.eq.s32.totalorder %s20, 0
      // Predicated region
      $region37: #{gcn_clusternet_forward.7} parent=35 // pred_check
        %p248 = pneg %p247
      $region38: #{gcn_clusternet_forward.7} parent=35 // pred_check_branch
        %250 = sbr.rel (%p248) target = $region40
      $region39: #{gcn_clusternet_forward.7} parent=35 // pred_region
        %vm251 = vcmask 261120
        %252 = vst.msk [vmem:[#allocation2] sm:$0xff] %vm251, 0.0
        %253 = vst.msk [vmem:[#allocation2 + $0x8] sm:$0xff] %vm251, 0.0
        %254 = vst.msk [vmem:[#allocation2 + $0x10] sm:$0xff] %vm251, 0.0
        %255 = vst.msk [vmem:[#allocation2 + $0x18] sm:$0xff] %vm251, 0.0
        %256 = vst.msk [vmem:[#allocation2 + $0x20] sm:$0xff] %vm251, 0.0
        %257 = vst.msk [vmem:[#allocation2 + $0x28] sm:$0xff] %vm251, 0.0
        %258 = vst.msk [vmem:[#allocation2 + $0x30] sm:$0xff] %vm251, 0.0
        %259 = vst.msk [vmem:[#allocation2 + $0x38] sm:$0xff] %vm251, 0.0
      $region40: #{gcn_clusternet_forward.7} parent=35 // pred_fallthru
        _
      %v260 = vld [vmem:[%s232] sm:$0xff]
      %v261 = vld [vmem:[%s232 + $0x8] sm:$0xff]
      %v262 = vunpack.c.l.s8.bf16 %v260
      %v263 = vunpack.c.h.s8.bf16 %v260
      %v264 = vunpack.c.l.s8.bf16 %v261
      %v265 = vunpack.c.h.s8.bf16 %v261
      %v266 = vld [vmem:[#allocation2] sm:$0xff]
      %v267 = vld [vmem:[#allocation2 + $0x8] sm:$0xff]
      %v268 = vld [vmem:[#allocation2 + $0x10] sm:$0xff]
      %v269 = vld [vmem:[#allocation2 + $0x18] sm:$0xff]
      %v270 = vld [vmem:[#allocation2 + $0x20] sm:$0xff]
      %v271 = vld [vmem:[#allocation2 + $0x28] sm:$0xff]
      %v272 = vld [vmem:[#allocation2 + $0x30] sm:$0xff]
      %v273 = vld [vmem:[#allocation2 + $0x38] sm:$0xff]
      %v274 = vld [vmem:[%s238] sm:$0xf]
      %v275 = vld [vmem:[%s238 + $0x4] sm:$0xf]
      %v276 = vld [vmem:[%s238 + $0x8] sm:$0xf]
      %v277 = vld [vmem:[%s238 + $0xc] sm:$0xf]
      %v278 = vld [vmem:[%s238 + $0x10] sm:$0xf]
      %v279 = vld [vmem:[%s238 + $0x14] sm:$0xf]
      %v280 = vld [vmem:[%s238 + $0x18] sm:$0xf]
      %v281 = vld [vmem:[%s238 + $0x1c] sm:$0xf]
      %v282 = vld [vmem:[%s238 + $0x20] sm:$0xf]
      %v283 = vld [vmem:[%s238 + $0x24] sm:$0xf]
      %v284 = vld [vmem:[%s238 + $0x28] sm:$0xf]
      %v285 = vld [vmem:[%s238 + $0x2c] sm:$0xf]
      %v286 = vld [vmem:[%s238 + $0x30] sm:$0xf]
      %v287 = vld [vmem:[%s238 + $0x34] sm:$0xf]
      %v288 = vld [vmem:[%s238 + $0x38] sm:$0xf]
      %v289 = vld [vmem:[%s238 + $0x3c] sm:$0xf]
      %v306 = vunpack.c.l.b16 %v274
      %v307 = vunpack.c.l.b16 %v275
      %v308 = vunpack.c.l.b16 %v276
      %v309 = vunpack.c.l.b16 %v277
      %v310 = vunpack.c.l.b16 %v278
      %v311 = vunpack.c.l.b16 %v279
      %v312 = vunpack.c.l.b16 %v280
      %v313 = vunpack.c.l.b16 %v281
      %v314 = vunpack.c.l.b16 %v282
      %v315 = vunpack.c.l.b16 %v283
      %v316 = vunpack.c.l.b16 %v284
      %v317 = vunpack.c.l.b16 %v285
      %v318 = vunpack.c.l.b16 %v286
      %v319 = vunpack.c.l.b16 %v287
      %v320 = vunpack.c.l.b16 %v288
      %v321 = vunpack.c.l.b16 %v289
      %v322 = vpack.c.b16 %v307, %v306
      %v323 = vpack.c.b16 %v309, %v308
      %v324 = vpack.c.b16 %v311, %v310
      %v325 = vpack.c.b16 %v313, %v312
      %v326 = vpack.c.b16 %v315, %v314
      %v327 = vpack.c.b16 %v317, %v316
      %v328 = vpack.c.b16 %v319, %v318
      %v329 = vpack.c.b16 %v321, %v320
      %338 = vmatprep.subr.bf16.mxu0 0
      %339 = vmatpush1.bf16.msra.mxu0 %v322
      %340 = vmatprep.subr.bf16.mxu0 0
      %341 = vmatpush1.bf16.msra.mxu0 %v323
      %342 = vmatprep.subr.bf16.mxu0 0
      %343 = vmatpush1.bf16.msra.mxu0 %v324
      %344 = vmatprep.subr.bf16.mxu0 0
      %345 = vmatpush1.bf16.msra.mxu0 %v325
      %346 = vmatprep.subr.bf16.mxu0 0
      %347 = vmatpush1.bf16.msra.mxu0 %v326
      %348 = vmatprep.subr.bf16.mxu0 0
      %349 = vmatpush1.bf16.msra.mxu0 %v327
      %350 = vmatprep.subr.bf16.mxu0 0
      %351 = vmatpush1.bf16.msra.mxu0 %v328
      %352 = vmatprep.subr.bf16.mxu0 0
      %353 = vmatpush1.bf16.msra.mxu0 %v329
      %354 = vmatprep.subr.bf16.mxu0 0
      %355 = vmatpush1.bf16.msra.mxu0 0
      %356 = vmatprep.subr.bf16.mxu0 0
      %357 = vmatpush1.bf16.msra.mxu0 0
      %358 = vmatprep.subr.bf16.mxu0 0
      %359 = vmatpush1.bf16.msra.mxu0 0
      %360 = vmatprep.subr.bf16.mxu0 0
      %361 = vmatpush1.bf16.msra.mxu0 0
      %362 = vmatprep.subr.bf16.mxu0 0
      %363 = vmatpush1.bf16.msra.mxu0 0
      %364 = vmatprep.subr.bf16.mxu0 0
      %365 = vmatpush1.bf16.msra.mxu0 0
      %366 = vmatprep.subr.bf16.mxu0 0
      %367 = vmatpush1.bf16.msra.mxu0 0
      %368 = vmatprep.subr.bf16.mxu0 0
      %369 = vmatpush1.bf16.msra.mxu0 0
      %370 = vmatprep.mubr.bf16.mxu0 0
      %371 = vmatmul.mubr.bf16.gmra.mrb[0].mxu0 %v262
      %v372 = vpop.f32.mrb[0].mxu0
      %v373 = vadd.f32 0.0, %v372
      %v374 = vpop.f32.mrb[0].mxu0
      %v375 = vpop.f32.mrb[0].mxu0
      %v376 = vadd.f32 0.0, %v375
      %v377 = vpop.f32.mrb[0].mxu0
      %378 = vmatprep.mubr.bf16.mxu0 0
      %379 = vmatmul.mubr.bf16.gmra.mrb[0].mxu0 %v263
      %v380 = vpop.f32.mrb[0].mxu0
      %v381 = vadd.f32 0.0, %v380
      %v382 = vpop.f32.mrb[0].mxu0
      %v383 = vpop.f32.mrb[0].mxu0
      %v384 = vadd.f32 0.0, %v383
      %v385 = vpop.f32.mrb[0].mxu0
      %386 = vmatprep.mubr.bf16.mxu0 0
      %387 = vmatmul.mubr.bf16.gmra.mrb[0].mxu0 %v264
      %v388 = vpop.f32.mrb[0].mxu0
      %v389 = vadd.f32 0.0, %v388
      %v390 = vpop.f32.mrb[0].mxu0
      %v391 = vpop.f32.mrb[0].mxu0
      %v392 = vadd.f32 0.0, %v391
      %v393 = vpop.f32.mrb[0].mxu0
      %394 = vmatprep.mubr.bf16.mxu0 0
      %395 = vmatmul.mubr.bf16.gmra.mrb[0].mxu0 %v265
      %v396 = vpop.f32.mrb[0].mxu0
      %v397 = vadd.f32 0.0, %v396
      %v398 = vpop.f32.mrb[0].mxu0
      %v399 = vpop.f32.mrb[0].mxu0
      %v400 = vadd.f32 0.0, %v399
      %v401 = vpop.f32.mrb[0].mxu0
      %402 = vdwg.mxu0
      %v403 = vadd.f32 %v266, %v373
      %v404 = vadd.f32 %v267, %v376
      %v405 = vadd.f32 %v268, %v381
      %v406 = vadd.f32 %v269, %v384
      %v407 = vadd.f32 %v270, %v389
      %v408 = vadd.f32 %v271, %v392
      %v409 = vadd.f32 %v272, %v397
      %v410 = vadd.f32 %v273, %v400
      %vm411 = vcmask 261120
      %412 = vst.msk [vmem:[#allocation2] sm:$0xff] %vm411, %v403
      %413 = vst.msk [vmem:[#allocation2 + $0x8] sm:$0xff] %vm411, %v404
      %414 = vst.msk [vmem:[#allocation2 + $0x10] sm:$0xff] %vm411, %v405
      %415 = vst.msk [vmem:[#allocation2 + $0x18] sm:$0xff] %vm411, %v406
      %416 = vst.msk [vmem:[#allocation2 + $0x20] sm:$0xff] %vm411, %v407
      %417 = vst.msk [vmem:[#allocation2 + $0x28] sm:$0xff] %vm411, %v408
      %418 = vst.msk [vmem:[#allocation2 + $0x30] sm:$0xff] %vm411, %v409
      %419 = vst.msk [vmem:[#allocation2 + $0x38] sm:$0xff] %vm411, %v410
      // Predicated region
      $region41: #{gcn_clusternet_forward.7} parent=35 // pred_check
        %p420 = pneg %p247
      $region42: #{gcn_clusternet_forward.7} parent=35 // pred_check_branch
        %422 = sbr.rel (%p420) target = $region44
      $region43: #{gcn_clusternet_forward.7} parent=35 // pred_region
        %v423 = vld [vmem:[#allocation2] sm:$0xff]
        %v424 = vld [vmem:[#allocation2 + $0x8] sm:$0xff]
        %v425 = vld [vmem:[#allocation2 + $0x10] sm:$0xff]
        %v426 = vld [vmem:[#allocation2 + $0x18] sm:$0xff]
        %v427 = vld [vmem:[#allocation2 + $0x20] sm:$0xff]
        %v428 = vld [vmem:[#allocation2 + $0x28] sm:$0xff]
        %v429 = vld [vmem:[#allocation2 + $0x30] sm:$0xff]
        %v430 = vld [vmem:[#allocation2 + $0x38] sm:$0xff]
        %v431 = vld [vmem:[%s2] sm:$0x1]
        %v433 = vlaneseq
        %v434 = vshrl.u32 %v433, 7
        %v435 = vsub.s32 0, %v434
        %v436 = vrot.slane %v431, %v435
        %v438 = vadd.f32 %v423, %v436
        %v439 = vadd.f32 %v424, %v436
        %v440 = vadd.f32 %v425, %v436
        %v441 = vadd.f32 %v426, %v436
        %v442 = vadd.f32 %v427, %v436
        %v443 = vadd.f32 %v428, %v436
        %v444 = vadd.f32 %v429, %v436
        %v445 = vadd.f32 %v430, %v436
        %v446 = vmax.f32 %v438, 0.0
        %v447 = vmax.f32 %v439, 0.0
        %v448 = vmax.f32 %v440, 0.0
        %v449 = vmax.f32 %v441, 0.0
        %v450 = vmax.f32 %v442, 0.0
        %v451 = vmax.f32 %v443, 0.0
        %v452 = vmax.f32 %v444, 0.0
        %v453 = vmax.f32 %v445, 0.0
        %v454 = vpack.c.bf16 %v447, %v446
        %v455 = vpack.c.bf16 %v449, %v448
        %v456 = vpack.c.bf16 %v451, %v450
        %v457 = vpack.c.bf16 %v453, %v452
        %v458 = vld [vmem:[%s3] sm:$0xf]
        %v459 = vld [vmem:[%s3 + $0x4] sm:$0xf]
        %v460 = vld [vmem:[%s3 + $0x8] sm:$0xf]
        %v461 = vld [vmem:[%s3 + $0xc] sm:$0xf]
        %v466 = vunpack.c.l.b16 %v458
        %v467 = vunpack.c.l.b16 %v459
        %v468 = vunpack.c.l.b16 %v460
        %v469 = vunpack.c.l.b16 %v461
        %v470 = vpack.c.b16 %v467, %v466
        %v471 = vpack.c.b16 %v469, %v468
        %v475 = vsel %vm411, %v454, 0
        %v478 = vsel %vm411, %v455, 0
        %v481 = vsel %vm411, %v456, 0
        %v484 = vsel %vm411, %v457, 0
        %486 = vmatprep.subr.bf16.mxu0 0
        %487 = vmatpush1.bf16.msra.mxu0 %v470
        %488 = vmatprep.subr.bf16.mxu0 0
        %489 = vmatpush1.bf16.msra.mxu0 %v471
        %490 = vmatprep.subr.bf16.mxu0 0
        %491 = vmatpush1.bf16.msra.mxu0 0
        %492 = vmatprep.subr.bf16.mxu0 0
        %493 = vmatpush1.bf16.msra.mxu0 0
        %494 = vmatprep.subr.bf16.mxu0 0
        %495 = vmatpush1.bf16.msra.mxu0 0
        %496 = vmatprep.subr.bf16.mxu0 0
        %497 = vmatpush1.bf16.msra.mxu0 0
        %498 = vmatprep.subr.bf16.mxu0 0
        %499 = vmatpush1.bf16.msra.mxu0 0
        %500 = vmatprep.subr.bf16.mxu0 0
        %501 = vmatpush1.bf16.msra.mxu0 0
        %502 = vmatprep.subr.bf16.mxu0 0
        %503 = vmatpush1.bf16.msra.mxu0 0
        %504 = vmatprep.subr.bf16.mxu0 0
        %505 = vmatpush1.bf16.msra.mxu0 0
        %506 = vmatprep.subr.bf16.mxu0 0
        %507 = vmatpush1.bf16.msra.mxu0 0
        %508 = vmatprep.subr.bf16.mxu0 0
        %509 = vmatpush1.bf16.msra.mxu0 0
        %510 = vmatprep.subr.bf16.mxu0 0
        %511 = vmatpush1.bf16.msra.mxu0 0
        %512 = vmatprep.subr.bf16.mxu0 0
        %513 = vmatpush1.bf16.msra.mxu0 0
        %514 = vmatprep.subr.bf16.mxu0 0
        %515 = vmatpush1.bf16.msra.mxu0 0
        %516 = vmatprep.subr.bf16.mxu0 0
        %517 = vmatpush1.bf16.msra.mxu0 0
        %518 = vmatprep.mubr.bf16.mxu0 0
        %519 = vmatmul.mubr.bf16.gmra.mrb[0].mxu0 %v475
        %v520 = vpop.f32.mrb[0].mxu0
        %v521 = vadd.f32 0.0, %v520
        %v522 = vpop.f32.mrb[0].mxu0
        %v523 = vpop.f32.mrb[0].mxu0
        %v524 = vadd.f32 0.0, %v523
        %v525 = vpop.f32.mrb[0].mxu0
        %526 = vmatprep.mubr.bf16.mxu0 0
        %527 = vmatmul.mubr.bf16.gmra.mrb[0].mxu0 %v478
        %v528 = vpop.f32.mrb[0].mxu0
        %v529 = vadd.f32 0.0, %v528
        %v530 = vpop.f32.mrb[0].mxu0
        %v531 = vpop.f32.mrb[0].mxu0
        %v532 = vadd.f32 0.0, %v531
        %v533 = vpop.f32.mrb[0].mxu0
        %534 = vmatprep.mubr.bf16.mxu0 0
        %535 = vmatmul.mubr.bf16.gmra.mrb[0].mxu0 %v481
        %v536 = vpop.f32.mrb[0].mxu0
        %v537 = vadd.f32 0.0, %v536
        %v538 = vpop.f32.mrb[0].mxu0
        %v539 = vpop.f32.mrb[0].mxu0
        %v540 = vadd.f32 0.0, %v539
        %v541 = vpop.f32.mrb[0].mxu0
        %542 = vmatprep.mubr.bf16.mxu0 0
        %543 = vmatmul.mubr.bf16.gmra.mrb[0].mxu0 %v484
        %v544 = vpop.f32.mrb[0].mxu0
        %v545 = vadd.f32 0.0, %v544
        %v546 = vpop.f32.mrb[0].mxu0
        %v547 = vpop.f32.mrb[0].mxu0
        %v548 = vadd.f32 0.0, %v547
        %v549 = vpop.f32.mrb[0].mxu0
        %550 = vdwg.mxu0
        %v551 = vpack.c.bf16 %v524, %v521
        %v552 = vpack.c.bf16 %v532, %v529
        %v553 = vpack.c.bf16 %v540, %v537
        %v554 = vpack.c.bf16 %v548, %v545
        %v559 = vunpack.c.l.b16 %v551
        %v560 = vunpack.c.h.b16 %v551
        %v561 = vunpack.c.l.b16 %v552
        %v562 = vunpack.c.h.b16 %v552
        %v563 = vunpack.c.l.b16 %v553
        %v564 = vunpack.c.h.b16 %v553
        %v565 = vunpack.c.l.b16 %v554
        %v566 = vunpack.c.h.b16 %v554
        %v567 = vpack.c.b16 %v559, %v559
        %v568 = vpack.c.b16 %v560, %v560
        %v569 = vpack.c.b16 %v561, %v561
        %v570 = vpack.c.b16 %v562, %v562
        %v571 = vpack.c.b16 %v563, %v563
        %v572 = vpack.c.b16 %v564, %v564
        %v573 = vpack.c.b16 %v565, %v565
        %v574 = vpack.c.b16 %v566, %v566
        %vm583 = vcmask 125952
        %584 = vst.msk [vmem:[%s244] sm:$0xf] %vm583, %v567
        %585 = vst.msk [vmem:[%s244 + $0x4] sm:$0xf] %vm583, %v568
        %586 = vst.msk [vmem:[%s244 + $0x8] sm:$0xf] %vm583, %v569
        %587 = vst.msk [vmem:[%s244 + $0xc] sm:$0xf] %vm583, %v570
        %588 = vst.msk [vmem:[%s244 + $0x10] sm:$0xf] %vm583, %v571
        %589 = vst.msk [vmem:[%s244 + $0x14] sm:$0xf] %vm583, %v572
        %590 = vst.msk [vmem:[%s244 + $0x18] sm:$0xf] %vm583, %v573
        %591 = vst.msk [vmem:[%s244 + $0x1c] sm:$0xf] %vm583, %v574
      $region44: #{gcn_clusternet_forward.7} parent=35 // pred_fallthru
        _
      %s592 = smul.u32 8, %s19
      %p593 = scmp.lt.s32.totalorder %s592, 15
      %s594 = scalar_select %p593, %s592, 15
      %s595 = smul.addr %s594, 4
      %s596 = scalar_lea.vmem %s4, %s595
      // Predicated region
      $region45: #{gcn_clusternet_forward.7} parent=35 // pred_check
        %p597 = pneg %p141
      $region46: #{gcn_clusternet_forward.7} parent=35 // pred_check_branch
        %599 = sbr.rel (%p597) target = $region48
      $region47: #{gcn_clusternet_forward.7} parent=35 // pred_region
        %s600 = smul.u32 8, %s19
      $region48: #{gcn_clusternet_forward.7} parent=35 // pred_fallthru
        _
    $region36: #{gcn_clusternet_forward.7} parent=5 // pred_fallthru
      _
    %p601 = scmp.le.s32.totalorder 2, %s10
    // Predicated region
    $region49: #{gcn_clusternet_forward.7} parent=5 // pred_check
      %p602 = pneg %p601
    $region50: #{gcn_clusternet_forward.7} parent=5 // pred_check_branch
      %604 = sbr.rel (%p602) target = $region52
    $region51: #{gcn_clusternet_forward.7} parent=5 // pred_region
      %s605 = ssub.s32 %s10, 2
      // Predicated region
      $region53: #{gcn_clusternet_forward.7} parent=51 // pred_check
        %p606 = pneg %p147
      $region54: #{gcn_clusternet_forward.7} parent=51 // pred_check_branch
        %608 = sbr.rel (%p606) target = $region56
      $region55: #{gcn_clusternet_forward.7} parent=51 // pred_region
        %s609 = smul.u32 8, %s21
        %p610 = scmp.lt.s32.totalorder %s609, 15
        %s611 = scalar_select %p610, %s609, 15
        %s612 = smul.addr %s611, 4
        %s613 = scalar_lea.vmem %s4, %s612
      $region56: #{gcn_clusternet_forward.7} parent=51 // pred_fallthru
        _
    $region52: #{gcn_clusternet_forward.7} parent=5 // pred_fallthru
      _
  $region6: #{gcn_clusternet_forward.7} parent=0 // loop_footer
    %s14 = sadd.s32 1, %s10
  $region7: #{gcn_clusternet_forward.7} parent=0 // loop_footer_branch
    %9 = sbr.rel target = $region3
  $region8: #{gcn_clusternet_forward.7} parent=0 // loop_exit
    _

// kernel: gcn_clusternet_forward.9
$region0: #{gcn_clusternet_forward.9}
  #allocation0 [shape = 'u32[]', space=smem, size = 0x4, offset = 0x4, fixed_abs, tag = 'smem constant byte address 0x4 - core index']
  #allocation1 [shape = 'u32[144,128]{1,0:T(1,128)}', space=vmem, size = 0x12000, scoped, tag = 'internal scratch']
  #allocation2 [shape = 'f32[16,8]{1,0:T(8,128)}', space=vmem, size = 0x2000, scoped, tag = 'scratch operand']
  #allocation3 [shape = 'f32[1,8]{1,0:T(1,128)}', space=vmem, size = 0x200, scoped, tag = 'scratch operand']
  %s0 = inlined_call_operand.vmem [shape: f32[64,16], index: 0, kind: input, shape index: {}]
  %s1 = inlined_call_operand.vmem [shape: f32[16,8], index: 1, kind: input, shape index: {}]
  %s2 = inlined_call_operand.vmem [shape: f32[16,8], index: 2, kind: output, shape index: {}]
  %s3 = sld [smem:[#allocation0]]
  $region26: #{gcn_clusternet_forward.9} parent=0
    _
  %s5 = ssub.s32 1, %s3
  %s6 = scalar_select 0, %s5, %s3
  // Predicated region
  $region2: #{gcn_clusternet_forward.9} parent=0 // pred_check
    _
  $region3: #{gcn_clusternet_forward.9} parent=0 // pred_check_branch
    %8 = sbr.rel (0) target = $region5
  $region4: #{gcn_clusternet_forward.9} parent=0 // pred_region
    _
  $region5: #{gcn_clusternet_forward.9} parent=0 // pred_fallthru
    _
  // Predicated region
  $region6: #{gcn_clusternet_forward.9} parent=0 // pred_check
    _
  $region7: #{gcn_clusternet_forward.9} parent=0 // pred_check_branch
    %10 = sbr.rel (0) target = $region9
  $region8: #{gcn_clusternet_forward.9} parent=0 // pred_region
    _
  $region9: #{gcn_clusternet_forward.9} parent=0 // pred_fallthru
    _
  %p11 = scmp.eq.s32.totalorder 0, 0
  // Predicated region
  $region10: #{gcn_clusternet_forward.9} parent=0 // pred_check
    %p12 = pneg %p11
  $region11: #{gcn_clusternet_forward.9} parent=0 // pred_check_branch
    %14 = sbr.rel (%p12) target = $region13
  $region12: #{gcn_clusternet_forward.9} parent=0 // pred_region
    %vm15 = vcmask 64512
    %16 = vst.msk [vmem:[#allocation2] sm:$0xff] %vm15, 0.0
    %17 = vst.msk [vmem:[#allocation2 + $0x8] sm:$0xff] %vm15, 0.0
    %vm18 = vcmask 57344
    %19 = vst.msk [vmem:[#allocation3] sm:$0x1] %vm18, 0.0
  $region13: #{gcn_clusternet_forward.9} parent=0 // pred_fallthru
    _
  %v20 = vld [vmem:[%s0] sm:$0xff]
  %v21 = vld [vmem:[%s0 + $0x8] sm:$0xff]
  %v22 = vld [vmem:[%s0 + $0x10] sm:$0xff]
  %v23 = vld [vmem:[%s0 + $0x18] sm:$0xff]
  %v24 = vld [vmem:[%s0 + $0x20] sm:$0xff]
  %v25 = vld [vmem:[%s0 + $0x28] sm:$0xff]
  %v26 = vld [vmem:[%s0 + $0x30] sm:$0xff]
  %v27 = vld [vmem:[%s0 + $0x38] sm:$0xff]
  %v28 = vmul.f32 %v20, %v20
  %v29 = vmul.f32 %v21, %v21
  %v30 = vmul.f32 %v22, %v22
  %v31 = vmul.f32 %v23, %v23
  %v32 = vmul.f32 %v24, %v24
  %v33 = vmul.f32 %v25, %v25
  %v34 = vmul.f32 %v26, %v26
  %v35 = vmul.f32 %v27, %v27
  %vm36 = vcmask 130048
  %v37 = vsel %vm36, %v28, 0.0
  %38 = vadd.xlane.f32.xlu0 %v37
  %v39 = vpop.xlane.xlu0 %38
  %v40 = vsel %vm36, %v29, 0.0
  %41 = vadd.xlane.f32.xlu0 %v40
  %v42 = vpop.xlane.xlu0 %41
  %v43 = vsel %vm36, %v30, 0.0
  %44 = vadd.xlane.f32.xlu0 %v43
  %v45 = vpop.xlane.xlu0 %44
  %v46 = vsel %vm36, %v31, 0.0
  %47 = vadd.xlane.f32.xlu0 %v46
  %v48 = vpop.xlane.xlu0 %47
  %v49 = vsel %vm36, %v32, 0.0
  %50 = vadd.xlane.f32.xlu0 %v49
  %v51 = vpop.xlane.xlu0 %50
  %v52 = vsel %vm36, %v33, 0.0
  %53 = vadd.xlane.f32.xlu0 %v52
  %v54 = vpop.xlane.xlu0 %53
  %v55 = vsel %vm36, %v34, 0.0
  %56 = vadd.xlane.f32.xlu0 %v55
  %v57 = vpop.xlane.xlu0 %56
  %v58 = vsel %vm36, %v35, 0.0
  %59 = vadd.xlane.f32.xlu0 %v58
  %v60 = vpop.xlane.xlu0 %59
  %v61 = vmax.f32 %v39, 1e-24
  %v62 = vmax.f32 %v42, 1e-24
  %v63 = vmax.f32 %v45, 1e-24
  %v64 = vmax.f32 %v48, 1e-24
  %v65 = vmax.f32 %v51, 1e-24
  %v66 = vmax.f32 %v54, 1e-24
  %v67 = vmax.f32 %v57, 1e-24
  %v68 = vmax.f32 %v60, 1e-24
  %v69 = vrsqrt.pop %v61
  %v70 = vrsqrt.pop %v62
  %v71 = vrsqrt.pop %v63
  %v72 = vrsqrt.pop %v64
  %v73 = vrsqrt.pop %v65
  %v74 = vrsqrt.pop %v66
  %v75 = vrsqrt.pop %v67
  %v76 = vrsqrt.pop %v68
  %v77 = vmul.f32 %v20, %v69
  %v78 = vmul.f32 %v21, %v70
  %v79 = vmul.f32 %v22, %v71
  %v80 = vmul.f32 %v23, %v72
  %v81 = vmul.f32 %v24, %v73
  %v82 = vmul.f32 %v25, %v74
  %v83 = vmul.f32 %v26, %v75
  %v84 = vmul.f32 %v27, %v76
  %v85 = vld [vmem:[%s1] sm:$0xff]
  %v86 = vld [vmem:[%s1 + $0x8] sm:$0xff]
  %v88 = vsel %vm36, %v77, 0
  %v91 = vsel %vm36, %v78, 0
  %v94 = vsel %vm36, %v79, 0
  %v97 = vsel %vm36, %v80, 0
  %v100 = vsel %vm36, %v81, 0
  %v103 = vsel %vm36, %v82, 0
  %v106 = vsel %vm36, %v83, 0
  %v109 = vsel %vm36, %v84, 0
  %111 = vmatprep.subr.mxu0 0.0
  %112 = vmatpush1.msra.mxu0 %v85
  %113 = vmatprep.subr.mxu0 0.0
  %114 = vmatpush1.msra.mxu0 %v86
  %115 = vmatprep.subr.mxu0 0.0
  %116 = vmatpush1.msra.mxu0 0.0
  %117 = vmatprep.subr.mxu0 0.0
  %118 = vmatpush1.msra.mxu0 0.0
  %119 = vmatprep.subr.mxu0 0.0
  %120 = vmatpush1.msra.mxu0 0.0
  %121 = vmatprep.subr.mxu0 0.0
  %122 = vmatpush1.msra.mxu0 0.0
  %123 = vmatprep.subr.mxu0 0.0
  %124 = vmatpush1.msra.mxu0 0.0
  %125 = vmatprep.subr.mxu0 0.0
  %126 = vmatpush1.msra.mxu0 0.0
  %127 = vmatprep.subr.mxu0 0.0
  %128 = vmatpush1.msra.mxu0 0.0
  %129 = vmatprep.subr.mxu0 0.0
  %130 = vmatpush1.msra.mxu0 0.0
  %131 = vmatprep.subr.mxu0 0.0
  %132 = vmatpush1.msra.mxu0 0.0
  %133 = vmatprep.subr.mxu0 0.0
  %134 = vmatpush1.msra.mxu0 0.0
  %135 = vmatprep.subr.mxu0 0.0
  %136 = vmatpush1.msra.mxu0 0.0
  %137 = vmatprep.subr.mxu0 0.0
  %138 = vmatpush1.msra.mxu0 0.0
  %139 = vmatprep.subr.mxu0 0.0
  %140 = vmatpush1.msra.mxu0 0.0
  %141 = vmatprep.subr.mxu0 0.0
  %142 = vmatpush1.msra.mxu0 0.0
  %143 = vmatprep.subr.mxu0 0.0
  %144 = vmatpush1.msra.mxu0 0.0
  %145 = vmatprep.subr.mxu0 0.0
  %146 = vmatpush1.msra.mxu0 0.0
  %147 = vmatprep.subr.mxu0 0.0
  %148 = vmatpush1.msra.mxu0 0.0
  %149 = vmatprep.subr.mxu0 0.0
  %150 = vmatpush1.msra.mxu0 0.0
  %151 = vmatprep.subr.mxu0 0.0
  %152 = vmatpush1.msra.mxu0 0.0
  %153 = vmatprep.subr.mxu0 0.0
  %154 = vmatpush1.msra.mxu0 0.0
  %155 = vmatprep.subr.mxu0 0.0
  %156 = vmatpush1.msra.mxu0 0.0
  %157 = vmatprep.subr.mxu0 0.0
  %158 = vmatpush1.msra.mxu0 0.0
  %159 = vmatprep.subr.mxu0 0.0
  %160 = vmatpush1.msra.mxu0 0.0
  %161 = vmatprep.subr.mxu0 0.0
  %162 = vmatpush1.msra.mxu0 0.0
  %163 = vmatprep.subr.mxu0 0.0
  %164 = vmatpush1.msra.mxu0 0.0
  %165 = vmatprep.subr.mxu0 0.0
  %166 = vmatpush1.msra.mxu0 0.0
  %167 = vmatprep.subr.mxu0 0.0
  %168 = vmatpush1.msra.mxu0 0.0
  %169 = vmatprep.subr.mxu0 0.0
  %170 = vmatpush1.msra.mxu0 0.0
  %171 = vmatprep.subr.mxu0 0.0
  %172 = vmatpush1.msra.mxu0 0.0
  %173 = vmatprep.subr.mxu0 0.0
  %174 = vmatpush1.msra.mxu0 0.0
  %175 = vmatprep.mubr.f32.mxu0 0.0
  %176 = vmatmul.mubr.f32.gmra.mrb[0].mxu0 %v88
  %v177 = vpop.f32.mrb[0].mxu0
  %v178 = vadd.f32 0.0, %v177
  %v179 = vpop.f32.mrb[0].mxu0
  %180 = vmatprep.mubr.f32.mxu0 0.0
  %181 = vmatmul.mubr.f32.gmra.mrb[0].mxu0 %v91
  %v182 = vpop.f32.mrb[0].mxu0
  %v183 = vadd.f32 0.0, %v182
  %v184 = vpop.f32.mrb[0].mxu0
  %185 = vmatprep.mubr.f32.mxu0 0.0
  %186 = vmatmul.mubr.f32.gmra.mrb[0].mxu0 %v94
  %v187 = vpop.f32.mrb[0].mxu0
  %v188 = vadd.f32 0.0, %v187
  %v189 = vpop.f32.mrb[0].mxu0
  %190 = vmatprep.mubr.f32.mxu0 0.0
  %191 = vmatmul.mubr.f32.gmra.mrb[0].mxu0 %v97
  %v192 = vpop.f32.mrb[0].mxu0
  %v193 = vadd.f32 0.0, %v192
  %v194 = vpop.f32.mrb[0].mxu0
  %195 = vmatprep.mubr.f32.mxu0 0.0
  %196 = vmatmul.mubr.f32.gmra.mrb[0].mxu0 %v100
  %v197 = vpop.f32.mrb[0].mxu0
  %v198 = vadd.f32 0.0, %v197
  %v199 = vpop.f32.mrb[0].mxu0
  %200 = vmatprep.mubr.f32.mxu0 0.0
  %201 = vmatmul.mubr.f32.gmra.mrb[0].mxu0 %v103
  %v202 = vpop.f32.mrb[0].mxu0
  %v203 = vadd.f32 0.0, %v202
  %v204 = vpop.f32.mrb[0].mxu0
  %205 = vmatprep.mubr.f32.mxu0 0.0
  %206 = vmatmul.mubr.f32.gmra.mrb[0].mxu0 %v106
  %v207 = vpop.f32.mrb[0].mxu0
  %v208 = vadd.f32 0.0, %v207
  %v209 = vpop.f32.mrb[0].mxu0
  %210 = vmatprep.mubr.f32.mxu0 0.0
  %211 = vmatmul.mubr.f32.gmra.mrb[0].mxu0 %v109
  %v212 = vpop.f32.mrb[0].mxu0
  %v213 = vadd.f32 0.0, %v212
  %v214 = vpop.f32.mrb[0].mxu0
  %215 = vdwg.mxu0
  %v216 = vmul.f32 %v178, 5.0
  %v217 = vmul.f32 %v183, 5.0
  %v218 = vmul.f32 %v188, 5.0
  %v219 = vmul.f32 %v193, 5.0
  %v220 = vmul.f32 %v198, 5.0
  %v221 = vmul.f32 %v203, 5.0
  %v222 = vmul.f32 %v208, 5.0
  %v223 = vmul.f32 %v213, 5.0
  %vm224 = vcmask 64512
  %v225 = vsel %vm224, %v216, -inf
  %226 = vmax.xlane.f32.xlu0 %v225
  %v227 = vpop.xlane.xlu0 %226
  %v228 = vsel %vm224, %v217, -inf
  %229 = vmax.xlane.f32.xlu0 %v228
  %v230 = vpop.xlane.xlu0 %229
  %v231 = vsel %vm224, %v218, -inf
  %232 = vmax.xlane.f32.xlu0 %v231
  %v233 = vpop.xlane.xlu0 %232
  %v234 = vsel %vm224, %v219, -inf
  %235 = vmax.xlane.f32.xlu0 %v234
  %v236 = vpop.xlane.xlu0 %235
  %v237 = vsel %vm224, %v220, -inf
  %238 = vmax.xlane.f32.xlu0 %v237
  %v239 = vpop.xlane.xlu0 %238
  %v240 = vsel %vm224, %v221, -inf
  %241 = vmax.xlane.f32.xlu0 %v240
  %v242 = vpop.xlane.xlu0 %241
  %v243 = vsel %vm224, %v222, -inf
  %244 = vmax.xlane.f32.xlu0 %v243
  %v245 = vpop.xlane.xlu0 %244
  %v246 = vsel %vm224, %v223, -inf
  %247 = vmax.xlane.f32.xlu0 %v246
  %v248 = vpop.xlane.xlu0 %247
  %v249 = vsub.f32 %v216, %v227
  %v250 = vsub.f32 %v217, %v230
  %v251 = vsub.f32 %v218, %v233
  %v252 = vsub.f32 %v219, %v236
  %v253 = vsub.f32 %v220, %v239
  %v254 = vsub.f32 %v221, %v242
  %v255 = vsub.f32 %v222, %v245
  %v256 = vsub.f32 %v223, %v248
  %v257 = vmul.f32 %v249, 1.442695
  %v258 = vpow.pop %v257
  %v259 = vmul.f32 %v250, 1.442695
  %v260 = vpow.pop %v259
  %v261 = vmul.f32 %v251, 1.442695
  %v262 = vpow.pop %v261
  %v263 = vmul.f32 %v252, 1.442695
  %v264 = vpow.pop %v263
  %v265 = vmul.f32 %v253, 1.442695
  %v266 = vpow.pop %v265
  %v267 = vmul.f32 %v254, 1.442695
  %v268 = vpow.pop %v267
  %v269 = vmul.f32 %v255, 1.442695
  %v270 = vpow.pop %v269
  %v271 = vmul.f32 %v256, 1.442695
  %v272 = vpow.pop %v271
  %v273 = vsel %vm224, %v258, 0.0
  %274 = vadd.xlane.f32.xlu0 %v273
  %v275 = vpop.xlane.xlu0 %274
  %v276 = vsel %vm224, %v260, 0.0
  %277 = vadd.xlane.f32.xlu0 %v276
  %v278 = vpop.xlane.xlu0 %277
  %v279 = vsel %vm224, %v262, 0.0
  %280 = vadd.xlane.f32.xlu0 %v279
  %v281 = vpop.xlane.xlu0 %280
  %v282 = vsel %vm224, %v264, 0.0
  %283 = vadd.xlane.f32.xlu0 %v282
  %v284 = vpop.xlane.xlu0 %283
  %v285 = vsel %vm224, %v266, 0.0
  %286 = vadd.xlane.f32.xlu0 %v285
  %v287 = vpop.xlane.xlu0 %286
  %v288 = vsel %vm224, %v268, 0.0
  %289 = vadd.xlane.f32.xlu0 %v288
  %v290 = vpop.xlane.xlu0 %289
  %v291 = vsel %vm224, %v270, 0.0
  %292 = vadd.xlane.f32.xlu0 %v291
  %v293 = vpop.xlane.xlu0 %292
  %v294 = vsel %vm224, %v272, 0.0
  %295 = vadd.xlane.f32.xlu0 %v294
  %v296 = vpop.xlane.xlu0 %295
  %v297 = vrcp.pop %v275
  %v298 = vrcp.pop %v278
  %v299 = vrcp.pop %v281
  %v300 = vrcp.pop %v284
  %v301 = vrcp.pop %v287
  %v302 = vrcp.pop %v290
  %v303 = vrcp.pop %v293
  %v304 = vrcp.pop %v296
  %v305 = vmul.f32 %v258, %v297
  %v306 = vmul.f32 %v260, %v298
  %v307 = vmul.f32 %v262, %v299
  %v308 = vmul.f32 %v264, %v300
  %v309 = vmul.f32 %v266, %v301
  %v310 = vmul.f32 %v268, %v302
  %v311 = vmul.f32 %v270, %v303
  %v312 = vmul.f32 %v272, %v304
  %v313 = vlaneseq
  %v314 = vshrl.u32 %v313, 7
  %v315 = vadd.s32 %v314, 8
  %v316 = vadd.s32 %v314, 16
  %v317 = vadd.s32 %v314, 24
  %v318 = vadd.s32 %v314, 32
  %v319 = vadd.s32 %v314, 40
  %v320 = vadd.s32 %v314, 48
  %v321 = vadd.s32 %v314, 56
  %s322 = smul.u32 0, 64
  %v323 = vstv %s322
  %v324 = vadd.s32 %v314, %v323
  %v325 = vadd.s32 %v315, %v323
  %v326 = vadd.s32 %v316, %v323
  %v327 = vadd.s32 %v317, %v323
  %v328 = vadd.s32 %v318, %v323
  %v329 = vadd.s32 %v319, %v323
  %v330 = vadd.s32 %v320, %v323
  %v331 = vadd.s32 %v321, %v323
  %vm332 = vcmp.lt.s32.totalorder %v324, 64
  %vm333 = vcmp.lt.s32.totalorder %v325, 64
  %vm334 = vcmp.lt.s32.totalorder %v326, 64
  %vm335 = vcmp.lt.s32.totalorder %v327, 64
  %vm336 = vcmp.lt.s32.totalorder %v328, 64
  %vm337 = vcmp.lt.s32.totalorder %v329, 64
  %vm338 = vcmp.lt.s32.totalorder %v330, 64
  %vm339 = vcmp.lt.s32.totalorder %v331, 64
  %v340 = vsel %vm332, 1, 0
  %v341 = vsel %vm333, 1, 0
  %v342 = vsel %vm334, 1, 0
  %v343 = vsel %vm335, 1, 0
  %v344 = vsel %vm336, 1, 0
  %v345 = vsel %vm337, 1, 0
  %v346 = vsel %vm338, 1, 0
  %v347 = vsel %vm339, 1, 0
  %vm348 = vcmp.eq.s32.totalorder %v340, 1
  %vm349 = vcmp.eq.s32.totalorder %v341, 1
  %vm350 = vcmp.eq.s32.totalorder %v342, 1
  %vm351 = vcmp.eq.s32.totalorder %v343, 1
  %vm352 = vcmp.eq.s32.totalorder %v344, 1
  %vm353 = vcmp.eq.s32.totalorder %v345, 1
  %vm354 = vcmp.eq.s32.totalorder %v346, 1
  %vm355 = vcmp.eq.s32.totalorder %v347, 1
  %v356 = vsel %vm348, %v305, 0.0
  %v357 = vsel %vm349, %v306, 0.0
  %v358 = vsel %vm350, %v307, 0.0
  %v359 = vsel %vm351, %v308, 0.0
  %v360 = vsel %vm352, %v309, 0.0
  %v361 = vsel %vm353, %v310, 0.0
  %v362 = vsel %vm354, %v311, 0.0
  %v363 = vsel %vm355, %v312, 0.0
  %v364 = vld [vmem:[#allocation2] sm:$0xff]
  %v365 = vld [vmem:[#allocation2 + $0x8] sm:$0xff]
  %366 = vxpose.xlu0.b32.start [1/16] %v77, 128
  %367 = vxpose.xlu0.b32.cont [2/16] %v78, 128
  %368 = vxpose.xlu0.b32.cont [3/16] %v79, 128
  %369 = vxpose.xlu0.b32.cont [4/16] %v80, 128
  %370 = vxpose.xlu0.b32.cont [5/16] %v81, 128
  %371 = vxpose.xlu0.b32.cont [6/16] %v82, 128
  %372 = vxpose.xlu0.b32.cont [7/16] %v83, 128
  %373 = vxpose.xlu0.b32.cont [8/16] %v84, 128
  %374 = vxpose.xlu0.b32.cont [9/16] 0.0, 128
  %375 = vxpose.xlu0.b32.cont [10/16] 0.0, 128
  %376 = vxpose.xlu0.b32.cont [11/16] 0.0, 128
  %377 = vxpose.xlu0.b32.cont [12/16] 0.0, 128
  %378 = vxpose.xlu0.b32.cont [13/16] 0.0, 128
  %379 = vxpose.xlu0.b32.cont [14/16] 0.0, 128
  %380 = vxpose.xlu0.b32.cont [15/16] 0.0, 128
  %381 = vxpose.xlu0.b32.end [16/16] 0.0, 128
  %v382 = vpop.trf.xlu0
  %v383 = vpop.trf.xlu0
  %v384 = vpop.trf.xlu0
  %v385 = vpop.trf.xlu0
  %v386 = vpop.trf.xlu0
  %v387 = vpop.trf.xlu0
  %v388 = vpop.trf.xlu0
  %v389 = vpop.trf.xlu0
  %v390 = vpop.trf.xlu0
  %v391 = vpop.trf.xlu0
  %v392 = vpop.trf.xlu0
  %v393 = vpop.trf.xlu0
  %v394 = vpop.trf.xlu0
  %v395 = vpop.trf.xlu0
  %v396 = vpop.trf.xlu0
  %v397 = vpop.trf.xlu0
  %vm398 = vcmask 523264
  %v400 = vsel %vm398, %v382, 0
  %v403 = vsel %vm398, %v383, 0
  %405 = vmatprep.subr.mxu0 0.0
  %406 = vmatpush1.msra.mxu0 %v356
  %407 = vmatprep.subr.mxu0 0.0
  %408 = vmatpush1.msra.mxu0 %v357
  %409 = vmatprep.subr.mxu0 0.0
  %410 = vmatpush1.msra.mxu0 %v358
  %411 = vmatprep.subr.mxu0 0.0
  %412 = vmatpush1.msra.mxu0 %v359
  %413 = vmatprep.subr.mxu0 0.0
  %414 = vmatpush1.msra.mxu0 %v360
  %415 = vmatprep.subr.mxu0 0.0
  %416 = vmatpush1.msra.mxu0 %v361
  %417 = vmatprep.subr.mxu0 0.0
  %418 = vmatpush1.msra.mxu0 %v362
  %419 = vmatprep.subr.mxu0 0.0
  %420 = vmatpush1.msra.mxu0 %v363
  %421 = vmatprep.subr.mxu0 0.0
  %422 = vmatpush1.msra.mxu0 0.0
  %423 = vmatprep.subr.mxu0 0.0
  %424 = vmatpush1.msra.mxu0 0.0
  %425 = vmatprep.subr.mxu0 0.0
  %426 = vmatpush1.msra.mxu0 0.0
  %427 = vmatprep.subr.mxu0 0.0
  %428 = vmatpush1.msra.mxu0 0.0
  %429 = vmatprep.subr.mxu0 0.0
  %430 = vmatpush1.msra.mxu0 0.0
  %431 = vmatprep.subr.mxu0 0.0
  %432 = vmatpush1.msra.mxu0 0.0
  %433 = vmatprep.subr.mxu0 0.0
  %434 = vmatpush1.msra.mxu0 0.0
  %435 = vmatprep.subr.mxu0 0.0
  %436 = vmatpush1.msra.mxu0 0.0
  %437 = vmatprep.subr.mxu0 0.0
  %438 = vmatpush1.msra.mxu0 0.0
  %439 = vmatprep.subr.mxu0 0.0
  %440 = vmatpush1.msra.mxu0 0.0
  %441 = vmatprep.subr.mxu0 0.0
  %442 = vmatpush1.msra.mxu0 0.0
  %443 = vmatprep.subr.mxu0 0.0
  %444 = vmatpush1.msra.mxu0 0.0
  %445 = vmatprep.subr.mxu0 0.0
  %446 = vmatpush1.msra.mxu0 0.0
  %447 = vmatprep.subr.mxu0 0.0
  %448 = vmatpush1.msra.mxu0 0.0
  %449 = vmatprep.subr.mxu0 0.0
  %450 = vmatpush1.msra.mxu0 0.0
  %451 = vmatprep.subr.mxu0 0.0
  %452 = vmatpush1.msra.mxu0 0.0
  %453 = vmatprep.subr.mxu0 0.0
  %454 = vmatpush1.msra.mxu0 0.0
  %455 = vmatprep.subr.mxu0 0.0
  %456 = vmatpush1.msra.mxu0 0.0
  %457 = vmatprep.subr.mxu0 0.0
  %458 = vmatpush1.msra.mxu0 0.0
  %459 = vmatprep.subr.mxu0 0.0
  %460 = vmatpush1.msra.mxu0 0.0
  %461 = vmatprep.subr.mxu0 0.0
  %462 = vmatpush1.msra.mxu0 0.0
  %463 = vmatprep.subr.mxu0 0.0
  %464 = vmatpush1.msra.mxu0 0.0
  %465 = vmatprep.subr.mxu0 0.0
  %466 = vmatpush1.msra.mxu0 0.0
  %467 = vmatprep.subr.mxu0 0.0
  %468 = vmatpush1.msra.mxu0 0.0
  %469 = vmatprep.mubr.f32.mxu0 0.0
  %470 = vmatmul.mubr.f32.gmra.mrb[0].mxu0 %v400
  %v471 = vpop.f32.mrb[0].mxu0
  %v472 = vadd.f32 0.0, %v471
  %v473 = vpop.f32.mrb[0].mxu0
  %474 = vmatprep.mubr.f32.mxu0 0.0
  %475 = vmatmul.mubr.f32.gmra.mrb[0].mxu0 %v403
  %v476 = vpop.f32.mrb[0].mxu0
  %v477 = vadd.f32 0.0, %v476
  %v478 = vpop.f32.mrb[0].mxu0
  %479 = vdwg.mxu0
  %v480 = vadd.f32 %v364, %v472
  %v481 = vadd.f32 %v365, %v477
  %482 = vst.msk [vmem:[#allocation2] sm:$0xff] %vm224, %v480
  %483 = vst.msk [vmem:[#allocation2 + $0x8] sm:$0xff] %vm224, %v481
  %v484 = vld [vmem:[#allocation3] sm:$0x1]
  %v485 = vsel %vm224, %v356, 0.0
  %v486 = vsel %vm224, %v357, 0.0
  %v487 = vadd.f32 %v485, %v486
  %v488 = vsel %vm224, %v358, 0.0
  %v489 = vadd.f32 %v487, %v488
  %v490 = vsel %vm224, %v359, 0.0
  %v491 = vadd.f32 %v489, %v490
  %v492 = vsel %vm224, %v360, 0.0
  %v493 = vadd.f32 %v491, %v492
  %v494 = vsel %vm224, %v361, 0.0
  %v495 = vadd.f32 %v493, %v494
  %v496 = vsel %vm224, %v362, 0.0
  %v497 = vadd.f32 %v495, %v496
  %v498 = vsel %vm224, %v363, 0.0
  %v499 = vadd.f32 %v497, %v498
  %v500 = vrot.slane %v499, 4
  %v501 = vadd.f32 %v499, %v500
  %v502 = vrot.slane %v501, 2
  %v503 = vadd.f32 %v501, %v502
  %v504 = vrot.slane %v503, 1
  %v505 = vadd.f32 %v503, %v504
  %v506 = vadd.f32 %v484, %v505
  %vm507 = vcmask 57344
  %508 = vst.msk [vmem:[#allocation3] sm:$0x1] %vm507, %v506
  // Predicated region
  $region14: #{gcn_clusternet_forward.9} parent=0 // pred_check
    %p509 = pneg %p11
  $region15: #{gcn_clusternet_forward.9} parent=0 // pred_check_branch
    %511 = sbr.rel (%p509) target = $region17
  $region16: #{gcn_clusternet_forward.9} parent=0 // pred_region
    %v512 = vld [vmem:[#allocation3] sm:$0x1]
    %v513 = vmax.f32 %v512, 1e-20
    %v514 = vrcp.pop %v513
    %v515 = vld [vmem:[#allocation2] sm:$0xff]
    %v516 = vld [vmem:[#allocation2 + $0x8] sm:$0xff]
    %v518 = vlaneseq
    %v519 = vshrl.u32 %v518, 7
    %v520 = vsub.s32 0, %v519
    %v521 = vrot.slane %v514, %v520
    %v523 = vmul.f32 %v515, %v521
    %v524 = vmul.f32 %v516, %v521
    %525 = vst.msk [vmem:[%s2] sm:$0xff] %vm224, %v523
    %526 = vst.msk [vmem:[%s2 + $0x8] sm:$0xff] %vm224, %v524
  $region17: #{gcn_clusternet_forward.9} parent=0 // pred_fallthru
    _
  // Predicated region
  $region18: #{gcn_clusternet_forward.9} parent=0 // pred_check
    _
  $region19: #{gcn_clusternet_forward.9} parent=0 // pred_check_branch
    %528 = sbr.rel (0) target = $region21
  $region20: #{gcn_clusternet_forward.9} parent=0 // pred_region
    _
  $region21: #{gcn_clusternet_forward.9} parent=0 // pred_fallthru
    _
  // Predicated region
  $region22: #{gcn_clusternet_forward.9} parent=0 // pred_check
    _
  $region23: #{gcn_clusternet_forward.9} parent=0 // pred_check_branch
    %530 = sbr.rel (0) target = $region25
  $region24: #{gcn_clusternet_forward.9} parent=0 // pred_region
    _
  $region25: #{gcn_clusternet_forward.9} parent=0 // pred_fallthru
    _

// kernel: gcn_clusternet_forward.11
$region0: #{gcn_clusternet_forward.11}
  #allocation0 [shape = 'u32[]', space=smem, size = 0x4, offset = 0x4, fixed_abs, tag = 'smem constant byte address 0x4 - core index']
  #allocation1 [shape = 'u32[144,128]{1,0:T(1,128)}', space=vmem, size = 0x12000, scoped, tag = 'internal scratch']
  %s0 = inlined_call_operand.vmem [shape: f32[64,16], index: 0, kind: input, shape index: {}]
  %s1 = inlined_call_operand.vmem [shape: f32[16,8], index: 1, kind: input, shape index: {}]
  %s2 = inlined_call_operand.vmem [shape: f32[64,8], index: 2, kind: output, shape index: {0}]
  %s3 = inlined_call_operand.vmem [shape: f32[64,8], index: 3, kind: output, shape index: {1}]
  %4 = xla_tuple %s2, %s3
  %s5 = sld [smem:[#allocation0]]
  $region26: #{gcn_clusternet_forward.11} parent=0
    _
  %s7 = ssub.s32 1, %s5
  %s8 = scalar_select 0, %s7, %s5
  // Predicated region
  $region2: #{gcn_clusternet_forward.11} parent=0 // pred_check
    _
  $region3: #{gcn_clusternet_forward.11} parent=0 // pred_check_branch
    %10 = sbr.rel (0) target = $region5
  $region4: #{gcn_clusternet_forward.11} parent=0 // pred_region
    _
  $region5: #{gcn_clusternet_forward.11} parent=0 // pred_fallthru
    _
  // Predicated region
  $region6: #{gcn_clusternet_forward.11} parent=0 // pred_check
    _
  $region7: #{gcn_clusternet_forward.11} parent=0 // pred_check_branch
    %12 = sbr.rel (0) target = $region9
  $region8: #{gcn_clusternet_forward.11} parent=0 // pred_region
    _
  $region9: #{gcn_clusternet_forward.11} parent=0 // pred_fallthru
    _
  %v13 = vld [vmem:[%s0] sm:$0xff]
  %v14 = vld [vmem:[%s0 + $0x8] sm:$0xff]
  %v15 = vld [vmem:[%s0 + $0x10] sm:$0xff]
  %v16 = vld [vmem:[%s0 + $0x18] sm:$0xff]
  %v17 = vld [vmem:[%s0 + $0x20] sm:$0xff]
  %v18 = vld [vmem:[%s0 + $0x28] sm:$0xff]
  %v19 = vld [vmem:[%s0 + $0x30] sm:$0xff]
  %v20 = vld [vmem:[%s0 + $0x38] sm:$0xff]
  %v21 = vmul.f32 %v13, %v13
  %v22 = vmul.f32 %v14, %v14
  %v23 = vmul.f32 %v15, %v15
  %v24 = vmul.f32 %v16, %v16
  %v25 = vmul.f32 %v17, %v17
  %v26 = vmul.f32 %v18, %v18
  %v27 = vmul.f32 %v19, %v19
  %v28 = vmul.f32 %v20, %v20
  %vm29 = vcmask 130048
  %v30 = vsel %vm29, %v21, 0.0
  %31 = vadd.xlane.f32.xlu0 %v30
  %v32 = vpop.xlane.xlu0 %31
  %v33 = vsel %vm29, %v22, 0.0
  %34 = vadd.xlane.f32.xlu0 %v33
  %v35 = vpop.xlane.xlu0 %34
  %v36 = vsel %vm29, %v23, 0.0
  %37 = vadd.xlane.f32.xlu0 %v36
  %v38 = vpop.xlane.xlu0 %37
  %v39 = vsel %vm29, %v24, 0.0
  %40 = vadd.xlane.f32.xlu0 %v39
  %v41 = vpop.xlane.xlu0 %40
  %v42 = vsel %vm29, %v25, 0.0
  %43 = vadd.xlane.f32.xlu0 %v42
  %v44 = vpop.xlane.xlu0 %43
  %v45 = vsel %vm29, %v26, 0.0
  %46 = vadd.xlane.f32.xlu0 %v45
  %v47 = vpop.xlane.xlu0 %46
  %v48 = vsel %vm29, %v27, 0.0
  %49 = vadd.xlane.f32.xlu0 %v48
  %v50 = vpop.xlane.xlu0 %49
  %v51 = vsel %vm29, %v28, 0.0
  %52 = vadd.xlane.f32.xlu0 %v51
  %v53 = vpop.xlane.xlu0 %52
  %v54 = vmax.f32 %v32, 1e-24
  %v55 = vmax.f32 %v35, 1e-24
  %v56 = vmax.f32 %v38, 1e-24
  %v57 = vmax.f32 %v41, 1e-24
  %v58 = vmax.f32 %v44, 1e-24
  %v59 = vmax.f32 %v47, 1e-24
  %v60 = vmax.f32 %v50, 1e-24
  %v61 = vmax.f32 %v53, 1e-24
  %v62 = vrsqrt.pop %v54
  %v63 = vrsqrt.pop %v55
  %v64 = vrsqrt.pop %v56
  %v65 = vrsqrt.pop %v57
  %v66 = vrsqrt.pop %v58
  %v67 = vrsqrt.pop %v59
  %v68 = vrsqrt.pop %v60
  %v69 = vrsqrt.pop %v61
  %v70 = vmul.f32 %v13, %v62
  %v71 = vmul.f32 %v14, %v63
  %v72 = vmul.f32 %v15, %v64
  %v73 = vmul.f32 %v16, %v65
  %v74 = vmul.f32 %v17, %v66
  %v75 = vmul.f32 %v18, %v67
  %v76 = vmul.f32 %v19, %v68
  %v77 = vmul.f32 %v20, %v69
  %v78 = vld [vmem:[%s1] sm:$0xff]
  %v79 = vld [vmem:[%s1 + $0x8] sm:$0xff]
  %v81 = vsel %vm29, %v70, 0
  %v84 = vsel %vm29, %v71, 0
  %v87 = vsel %vm29, %v72, 0
  %v90 = vsel %vm29, %v73, 0
  %v93 = vsel %vm29, %v74, 0
  %v96 = vsel %vm29, %v75, 0
  %v99 = vsel %vm29, %v76, 0
  %v102 = vsel %vm29, %v77, 0
  %104 = vmatprep.subr.mxu0 0.0
  %105 = vmatpush1.msra.mxu0 %v78
  %106 = vmatprep.subr.mxu0 0.0
  %107 = vmatpush1.msra.mxu0 %v79
  %108 = vmatprep.subr.mxu0 0.0
  %109 = vmatpush1.msra.mxu0 0.0
  %110 = vmatprep.subr.mxu0 0.0
  %111 = vmatpush1.msra.mxu0 0.0
  %112 = vmatprep.subr.mxu0 0.0
  %113 = vmatpush1.msra.mxu0 0.0
  %114 = vmatprep.subr.mxu0 0.0
  %115 = vmatpush1.msra.mxu0 0.0
  %116 = vmatprep.subr.mxu0 0.0
  %117 = vmatpush1.msra.mxu0 0.0
  %118 = vmatprep.subr.mxu0 0.0
  %119 = vmatpush1.msra.mxu0 0.0
  %120 = vmatprep.subr.mxu0 0.0
  %121 = vmatpush1.msra.mxu0 0.0
  %122 = vmatprep.subr.mxu0 0.0
  %123 = vmatpush1.msra.mxu0 0.0
  %124 = vmatprep.subr.mxu0 0.0
  %125 = vmatpush1.msra.mxu0 0.0
  %126 = vmatprep.subr.mxu0 0.0
  %127 = vmatpush1.msra.mxu0 0.0
  %128 = vmatprep.subr.mxu0 0.0
  %129 = vmatpush1.msra.mxu0 0.0
  %130 = vmatprep.subr.mxu0 0.0
  %131 = vmatpush1.msra.mxu0 0.0
  %132 = vmatprep.subr.mxu0 0.0
  %133 = vmatpush1.msra.mxu0 0.0
  %134 = vmatprep.subr.mxu0 0.0
  %135 = vmatpush1.msra.mxu0 0.0
  %136 = vmatprep.subr.mxu0 0.0
  %137 = vmatpush1.msra.mxu0 0.0
  %138 = vmatprep.subr.mxu0 0.0
  %139 = vmatpush1.msra.mxu0 0.0
  %140 = vmatprep.subr.mxu0 0.0
  %141 = vmatpush1.msra.mxu0 0.0
  %142 = vmatprep.subr.mxu0 0.0
  %143 = vmatpush1.msra.mxu0 0.0
  %144 = vmatprep.subr.mxu0 0.0
  %145 = vmatpush1.msra.mxu0 0.0
  %146 = vmatprep.subr.mxu0 0.0
  %147 = vmatpush1.msra.mxu0 0.0
  %148 = vmatprep.subr.mxu0 0.0
  %149 = vmatpush1.msra.mxu0 0.0
  %150 = vmatprep.subr.mxu0 0.0
  %151 = vmatpush1.msra.mxu0 0.0
  %152 = vmatprep.subr.mxu0 0.0
  %153 = vmatpush1.msra.mxu0 0.0
  %154 = vmatprep.subr.mxu0 0.0
  %155 = vmatpush1.msra.mxu0 0.0
  %156 = vmatprep.subr.mxu0 0.0
  %157 = vmatpush1.msra.mxu0 0.0
  %158 = vmatprep.subr.mxu0 0.0
  %159 = vmatpush1.msra.mxu0 0.0
  %160 = vmatprep.subr.mxu0 0.0
  %161 = vmatpush1.msra.mxu0 0.0
  %162 = vmatprep.subr.mxu0 0.0
  %163 = vmatpush1.msra.mxu0 0.0
  %164 = vmatprep.subr.mxu0 0.0
  %165 = vmatpush1.msra.mxu0 0.0
  %166 = vmatprep.subr.mxu0 0.0
  %167 = vmatpush1.msra.mxu0 0.0
  %168 = vmatprep.mubr.f32.mxu0 0.0
  %169 = vmatmul.mubr.f32.gmra.mrb[0].mxu0 %v81
  %v170 = vpop.f32.mrb[0].mxu0
  %v171 = vadd.f32 0.0, %v170
  %v172 = vpop.f32.mrb[0].mxu0
  %173 = vmatprep.mubr.f32.mxu0 0.0
  %174 = vmatmul.mubr.f32.gmra.mrb[0].mxu0 %v84
  %v175 = vpop.f32.mrb[0].mxu0
  %v176 = vadd.f32 0.0, %v175
  %v177 = vpop.f32.mrb[0].mxu0
  %178 = vmatprep.mubr.f32.mxu0 0.0
  %179 = vmatmul.mubr.f32.gmra.mrb[0].mxu0 %v87
  %v180 = vpop.f32.mrb[0].mxu0
  %v181 = vadd.f32 0.0, %v180
  %v182 = vpop.f32.mrb[0].mxu0
  %183 = vmatprep.mubr.f32.mxu0 0.0
  %184 = vmatmul.mubr.f32.gmra.mrb[0].mxu0 %v90
  %v185 = vpop.f32.mrb[0].mxu0
  %v186 = vadd.f32 0.0, %v185
  %v187 = vpop.f32.mrb[0].mxu0
  %188 = vmatprep.mubr.f32.mxu0 0.0
  %189 = vmatmul.mubr.f32.gmra.mrb[0].mxu0 %v93
  %v190 = vpop.f32.mrb[0].mxu0
  %v191 = vadd.f32 0.0, %v190
  %v192 = vpop.f32.mrb[0].mxu0
  %193 = vmatprep.mubr.f32.mxu0 0.0
  %194 = vmatmul.mubr.f32.gmra.mrb[0].mxu0 %v96
  %v195 = vpop.f32.mrb[0].mxu0
  %v196 = vadd.f32 0.0, %v195
  %v197 = vpop.f32.mrb[0].mxu0
  %198 = vmatprep.mubr.f32.mxu0 0.0
  %199 = vmatmul.mubr.f32.gmra.mrb[0].mxu0 %v99
  %v200 = vpop.f32.mrb[0].mxu0
  %v201 = vadd.f32 0.0, %v200
  %v202 = vpop.f32.mrb[0].mxu0
  %203 = vmatprep.mubr.f32.mxu0 0.0
  %204 = vmatmul.mubr.f32.gmra.mrb[0].mxu0 %v102
  %v205 = vpop.f32.mrb[0].mxu0
  %v206 = vadd.f32 0.0, %v205
  %v207 = vpop.f32.mrb[0].mxu0
  %208 = vdwg.mxu0
  %v209 = vmul.f32 %v171, 5.0
  %v210 = vmul.f32 %v176, 5.0
  %v211 = vmul.f32 %v181, 5.0
  %v212 = vmul.f32 %v186, 5.0
  %v213 = vmul.f32 %v191, 5.0
  %v214 = vmul.f32 %v196, 5.0
  %v215 = vmul.f32 %v201, 5.0
  %v216 = vmul.f32 %v206, 5.0
  %vm217 = vcmask 64512
  %v218 = vsel %vm217, %v209, -inf
  %219 = vmax.xlane.f32.xlu0 %v218
  %v220 = vpop.xlane.xlu0 %219
  %v221 = vsel %vm217, %v210, -inf
  %222 = vmax.xlane.f32.xlu0 %v221
  %v223 = vpop.xlane.xlu0 %222
  %v224 = vsel %vm217, %v211, -inf
  %225 = vmax.xlane.f32.xlu0 %v224
  %v226 = vpop.xlane.xlu0 %225
  %v227 = vsel %vm217, %v212, -inf
  %228 = vmax.xlane.f32.xlu0 %v227
  %v229 = vpop.xlane.xlu0 %228
  %v230 = vsel %vm217, %v213, -inf
  %231 = vmax.xlane.f32.xlu0 %v230
  %v232 = vpop.xlane.xlu0 %231
  %v233 = vsel %vm217, %v214, -inf
  %234 = vmax.xlane.f32.xlu0 %v233
  %v235 = vpop.xlane.xlu0 %234
  %v236 = vsel %vm217, %v215, -inf
  %237 = vmax.xlane.f32.xlu0 %v236
  %v238 = vpop.xlane.xlu0 %237
  %v239 = vsel %vm217, %v216, -inf
  %240 = vmax.xlane.f32.xlu0 %v239
  %v241 = vpop.xlane.xlu0 %240
  %v242 = vsub.f32 %v209, %v220
  %v243 = vsub.f32 %v210, %v223
  %v244 = vsub.f32 %v211, %v226
  %v245 = vsub.f32 %v212, %v229
  %v246 = vsub.f32 %v213, %v232
  %v247 = vsub.f32 %v214, %v235
  %v248 = vsub.f32 %v215, %v238
  %v249 = vsub.f32 %v216, %v241
  %v250 = vmul.f32 %v242, 1.442695
  %v251 = vpow.pop %v250
  %v252 = vmul.f32 %v243, 1.442695
  %v253 = vpow.pop %v252
  %v254 = vmul.f32 %v244, 1.442695
  %v255 = vpow.pop %v254
  %v256 = vmul.f32 %v245, 1.442695
  %v257 = vpow.pop %v256
  %v258 = vmul.f32 %v246, 1.442695
  %v259 = vpow.pop %v258
  %v260 = vmul.f32 %v247, 1.442695
  %v261 = vpow.pop %v260
  %v262 = vmul.f32 %v248, 1.442695
  %v263 = vpow.pop %v262
  %v264 = vmul.f32 %v249, 1.442695
  %v265 = vpow.pop %v264
  %v266 = vsel %vm217, %v251, 0.0
  %267 = vadd.xlane.f32.xlu0 %v266
  %v268 = vpop.xlane.xlu0 %267
  %v269 = vsel %vm217, %v253, 0.0
  %270 = vadd.xlane.f32.xlu0 %v269
  %v271 = vpop.xlane.xlu0 %270
  %v272 = vsel %vm217, %v255, 0.0
  %273 = vadd.xlane.f32.xlu0 %v272
  %v274 = vpop.xlane.xlu0 %273
  %v275 = vsel %vm217, %v257, 0.0
  %276 = vadd.xlane.f32.xlu0 %v275
  %v277 = vpop.xlane.xlu0 %276
  %v278 = vsel %vm217, %v259, 0.0
  %279 = vadd.xlane.f32.xlu0 %v278
  %v280 = vpop.xlane.xlu0 %279
  %v281 = vsel %vm217, %v261, 0.0
  %282 = vadd.xlane.f32.xlu0 %v281
  %v283 = vpop.xlane.xlu0 %282
  %v284 = vsel %vm217, %v263, 0.0
  %285 = vadd.xlane.f32.xlu0 %v284
  %v286 = vpop.xlane.xlu0 %285
  %v287 = vsel %vm217, %v265, 0.0
  %288 = vadd.xlane.f32.xlu0 %v287
  %v289 = vpop.xlane.xlu0 %288
  %v290 = vrcp.pop %v268
  %v291 = vrcp.pop %v271
  %v292 = vrcp.pop %v274
  %v293 = vrcp.pop %v277
  %v294 = vrcp.pop %v280
  %v295 = vrcp.pop %v283
  %v296 = vrcp.pop %v286
  %v297 = vrcp.pop %v289
  %v298 = vmul.f32 %v251, %v290
  %v299 = vmul.f32 %v253, %v291
  %v300 = vmul.f32 %v255, %v292
  %v301 = vmul.f32 %v257, %v293
  %v302 = vmul.f32 %v259, %v294
  %v303 = vmul.f32 %v261, %v295
  %v304 = vmul.f32 %v263, %v296
  %v305 = vmul.f32 %v265, %v297
  %306 = vst.msk [vmem:[%s2] sm:$0xff] %vm217, %v298
  %307 = vst.msk [vmem:[%s2 + $0x8] sm:$0xff] %vm217, %v299
  %308 = vst.msk [vmem:[%s2 + $0x10] sm:$0xff] %vm217, %v300
  %309 = vst.msk [vmem:[%s2 + $0x18] sm:$0xff] %vm217, %v301
  %310 = vst.msk [vmem:[%s2 + $0x20] sm:$0xff] %vm217, %v302
  %311 = vst.msk [vmem:[%s2 + $0x28] sm:$0xff] %vm217, %v303
  %312 = vst.msk [vmem:[%s2 + $0x30] sm:$0xff] %vm217, %v304
  %313 = vst.msk [vmem:[%s2 + $0x38] sm:$0xff] %vm217, %v305
  %314 = vst.msk [vmem:[%s3] sm:$0xff] %vm217, %v171
  %315 = vst.msk [vmem:[%s3 + $0x8] sm:$0xff] %vm217, %v176
  %316 = vst.msk [vmem:[%s3 + $0x10] sm:$0xff] %vm217, %v181
  %317 = vst.msk [vmem:[%s3 + $0x18] sm:$0xff] %vm217, %v186
  %318 = vst.msk [vmem:[%s3 + $0x20] sm:$0xff] %vm217, %v191
  %319 = vst.msk [vmem:[%s3 + $0x28] sm:$0xff] %vm217, %v196
  %320 = vst.msk [vmem:[%s3 + $0x30] sm:$0xff] %vm217, %v201
  %321 = vst.msk [vmem:[%s3 + $0x38] sm:$0xff] %vm217, %v206
  // Predicated region
  $region10: #{gcn_clusternet_forward.11} parent=0 // pred_check
    _
  $region11: #{gcn_clusternet_forward.11} parent=0 // pred_check_branch
    %323 = sbr.rel (0) target = $region13
  $region12: #{gcn_clusternet_forward.11} parent=0 // pred_region
    _
  $region13: #{gcn_clusternet_forward.11} parent=0 // pred_fallthru
    _
  // Predicated region
  $region14: #{gcn_clusternet_forward.11} parent=0 // pred_check
    _
  $region15: #{gcn_clusternet_forward.11} parent=0 // pred_check_branch
    %325 = sbr.rel (0) target = $region17
  $region16: #{gcn_clusternet_forward.11} parent=0 // pred_region
    _
  $region17: #{gcn_clusternet_forward.11} parent=0 // pred_fallthru
    _
  // Predicated region
  $region18: #{gcn_clusternet_forward.11} parent=0 // pred_check
    _
  $region19: #{gcn_clusternet_forward.11} parent=0 // pred_check_branch
    %327 = sbr.rel (0) target = $region21
  $region20: #{gcn_clusternet_forward.11} parent=0 // pred_region
    _
  $region21: #{gcn_clusternet_forward.11} parent=0 // pred_fallthru
    _
  // Predicated region
  $region22: #{gcn_clusternet_forward.11} parent=0 // pred_check
    _
  $region23: #{gcn_clusternet_forward.11} parent=0 // pred_check_branch
    %329 = sbr.rel (0) target = $region25
  $region24: #{gcn_clusternet_forward.11} parent=0 // pred_region
    _
  $region25: #{gcn_clusternet_forward.11} parent=0 // pred_fallthru
    _

</llo_original>
